<compile_context>
chip_gen: v7x
topology: tpu7x:2x2x1
jax: 0.10.0
libtpu: 0.0.40
codegen_flags: <defaults>
</compile_context>

<pallas_src>
import functools

import jax
import jax.numpy as jnp
from jax.experimental import pallas as pl
from jax.experimental.pallas import tpu as pltpu

PREFIX_LENGTH = 5


def _round_up(x, m):
    return (x + m - 1) // m * m


# ----------------------------------------------------------------------------
# Kernel 1: fused image-encoder linear + MLP (Linear -> Tanh -> Linear)
# ----------------------------------------------------------------------------
def _vision_mlp_kernel(x_ref, ew_ref, eb_ref, w1_ref, b1_ref, w2_ref, b2_ref, o_ref):
    # bf16 into the MXU, f32 accumulation; tanh in f32 on the EUP (v5e has no bf16 EUP).
    x = x_ref[...].astype(jnp.bfloat16)
    h0 = jnp.dot(x, ew_ref[...], preferred_element_type=jnp.float32) + eb_ref[...]
    h1 = jnp.dot(h0.astype(jnp.bfloat16), w1_ref[...],
                 preferred_element_type=jnp.float32) + b1_ref[...]
    h1 = jnp.tanh(h1)
    h2 = jnp.dot(h1.astype(jnp.bfloat16), w2_ref[...],
                 preferred_element_type=jnp.float32) + b2_ref[...]
    o_ref[...] = h2.astype(o_ref.dtype)


def fused_vision_mlp(x, enc_w, enc_b, w1, b1, w2, b2,
                     *, vmem_limit_bytes=64 * 1024 * 1024):
    """x:(B, Din) f32 -> (B, out) bf16; all three linears fused in VMEM."""
    B, Din = x.shape
    E = enc_w.shape[1]
    mid = w1.shape[1]
    out = w2.shape[1]

    tb = 128 if B >= 128 else _round_up(max(B, 1), 8)
    B_pad = _round_up(B, tb)
    if B_pad != B:
        x = jnp.pad(x, ((0, B_pad - B), (0, 0)))

    y = pl.pallas_call(
        _vision_mlp_kernel,
        out_shape=jax.ShapeDtypeStruct((B_pad, out), jnp.bfloat16),
        grid=(B_pad // tb,),
        in_specs=[
            pl.BlockSpec((tb, Din), lambda i: (i, 0)),
            pl.BlockSpec((Din, E), lambda i: (0, 0)),
            pl.BlockSpec((1, E), lambda i: (0, 0)),
            pl.BlockSpec((E, mid), lambda i: (0, 0)),
            pl.BlockSpec((1, mid), lambda i: (0, 0)),
            pl.BlockSpec((mid, out), lambda i: (0, 0)),
            pl.BlockSpec((1, out), lambda i: (0, 0)),
        ],
        out_specs=pl.BlockSpec((tb, out), lambda i: (i, 0)),
        compiler_params=pltpu.CompilerParams(
            dimension_semantics=("parallel",),
            vmem_limit_bytes=vmem_limit_bytes,
        ),
    )(x, enc_w, enc_b, w1, b1, w2, b2)
    return y[:B]


# ----------------------------------------------------------------------------
# Kernel 2: fused LM head + shifted cross-entropy (online logsumexp over vocab)
# ----------------------------------------------------------------------------
def _lmhead_ce_kernel(x_ref, w_ref, b_ref, lbl_ref,
                      logits_ref, loss_ref, valid_ref,
                      m_scr, l_scr, t_scr, *, tv):
    j = pl.program_id(1)

    @pl.when(j == 0)
    def _init():
        m_scr[...] = jnp.full_like(m_scr, -jnp.inf)
        l_scr[...] = jnp.zeros_like(l_scr)
        t_scr[...] = jnp.zeros_like(t_scr)

    # (tm, K) bf16 @ (K, tv) bf16 -> f32 accumulate on the MXU.
    logits = jnp.dot(x_ref[...], w_ref[...], preferred_element_type=jnp.float32)
    logits = logits + b_ref[...]                          # (tm, tv) + (1, tv)
    logits_ref[...] = logits.astype(logits_ref.dtype)     # bf16, lane-dense store

    labels = lbl_ref[...]                                  # (tm, 1) int32

    # online logsumexp across vocab tiles (f32 on VPU/EUP)
    m_prev = m_scr[...]
    m_new = jnp.maximum(m_prev, jnp.max(logits, axis=-1, keepdims=True))
    alpha = jnp.exp(m_prev - m_new)
    l_scr[...] = l_scr[...] * alpha + jnp.sum(
        jnp.exp(logits - m_new), axis=-1, keepdims=True)
    m_scr[...] = m_new

    # running target-logit extraction for this vocab tile
    vocab_ids = jax.lax.broadcasted_iota(jnp.int32, logits.shape, 1) + j * tv
    t_scr[...] += jnp.sum(jnp.where(vocab_ids == labels, logits, 0.0),
                          axis=-1, keepdims=True)

    @pl.when(j == pl.num_programs(1) - 1)
    def _finalize():
        valid = (labels != -100).astype(jnp.float32)
        lse = m_scr[...] + jnp.log(l_scr[...])
        loss_ref[...] = valid * (lse - t_scr[...])
        valid_ref[...] = valid


def fused_lmhead_xent(x, w, b, labels, *, tm=None, tv=None,
                      vmem_limit_bytes=96 * 1024 * 1024):
    """x:(M,K) bf16, w:(K,V) bf16, b:(1,V) f32, labels:(M,) int32 (-100 ignored).

    Returns (logits (M,V) bf16, mean loss scalar f32).
    """
    M, K = x.shape
    K2, V = w.shape
    assert K == K2 and V % 128 == 0

    if tm is None:
        tm = 128 if M >= 128 else _round_up(max(M, 1), 16)
    if tv is None:
        tv = next((c for c in (512, 256, 128) if V % c == 0), V)

    M_pad = _round_up(M, tm)
    if M_pad != M:
        x = jnp.pad(x, ((0, M_pad - M), (0, 0)))
        labels = jnp.pad(labels, ((0, M_pad - M),), constant_values=-100)
    labels2 = labels.reshape(M_pad, 1).astype(jnp.int32)

    kernel = functools.partial(_lmhead_ce_kernel, tv=tv)
    logits, loss_rows, valid_rows = pl.pallas_call(
        kernel,
        out_shape=(
            jax.ShapeDtypeStruct((M_pad, V), jnp.bfloat16),
            jax.ShapeDtypeStruct((M_pad, 1), jnp.float32),
            jax.ShapeDtypeStruct((M_pad, 1), jnp.float32),
        ),
        grid=(M_pad // tm, V // tv),
        in_specs=[
            pl.BlockSpec((tm, K), lambda i, j: (i, 0)),
            pl.BlockSpec((K, tv), lambda i, j: (0, j)),
            pl.BlockSpec((1, tv), lambda i, j: (0, j)),   # per-N-tile bias slice
            pl.BlockSpec((tm, 1), lambda i, j: (i, 0)),
        ],
        out_specs=(
            pl.BlockSpec((tm, tv), lambda i, j: (i, j)),
            pl.BlockSpec((tm, 1), lambda i, j: (i, 0)),   # resident across vocab axis
            pl.BlockSpec((tm, 1), lambda i, j: (i, 0)),
        ),
        scratch_shapes=[
            pltpu.VMEM((tm, 1), jnp.float32),   # running max
            pltpu.VMEM((tm, 1), jnp.float32),   # running sum-exp
            pltpu.VMEM((tm, 1), jnp.float32),   # running target logit
        ],
        compiler_params=pltpu.CompilerParams(
            dimension_semantics=("parallel", "arbitrary"),
            vmem_limit_bytes=vmem_limit_bytes,
        ),
    )(x, w, b, labels2)

    loss = jnp.sum(loss_rows) / jnp.maximum(jnp.sum(valid_rows), 1.0)
    return logits[:M], loss


# ----------------------------------------------------------------------------
# Model (parameters built deterministically in-script)
# ----------------------------------------------------------------------------
class GenerativeImage2TextPallas:
    def __init__(self, key, *, img_shape, embed_dim, hidden_size, vocab_size):
        C, H, W = img_shape
        self.embed_dim = embed_dim            # image_encoder.embed_dim
        self.hidden_size = hidden_size        # language_model.config.hidden_size
        self.vocab_size = vocab_size
        in_dim = C * H * W

        ks = jax.random.split(key, 8)
        s = lambda fan_in: 1.0 / jnp.sqrt(jnp.float32(fan_in))

        # synthetic image encoder: flatten -> linear -> (B, embed_dim); bf16 weights
        self.enc_w = (jax.random.normal(ks[0], (in_dim, embed_dim), jnp.float32)
                      * s(in_dim)).astype(jnp.bfloat16)
        self.enc_b = jax.random.normal(ks[1], (1, embed_dim), jnp.float32) * 0.01

        # visual_projection = MLP((E, hidden*5//2, hidden*5)) with Tanh between
        mid = hidden_size * PREFIX_LENGTH // 2
        out = hidden_size * PREFIX_LENGTH
        self.mlp_w1 = (jax.random.normal(ks[2], (embed_dim, mid), jnp.float32)
                       * s(embed_dim)).astype(jnp.bfloat16)
        self.mlp_b1 = jax.random.normal(ks[3], (1, mid), jnp.float32) * 0.01
        self.mlp_w2 = (jax.random.normal(ks[4], (mid, out), jnp.float32)
                       * s(mid)).astype(jnp.bfloat16)
        self.mlp_b2 = jax.random.normal(ks[5], (1, out), jnp.float32) * 0.01

        # language model stand-in: embedding table + LM head (bf16)
        self.wte = (jax.random.normal(ks[6], (vocab_size, hidden_size), jnp.float32)
                    * 0.02).astype(jnp.bfloat16)
        self.lm_head_w = (jax.random.normal(ks[7], (hidden_size, vocab_size), jnp.float32)
                          * s(hidden_size)).astype(jnp.bfloat16)
        self.lm_head_b = jnp.zeros((1, vocab_size), jnp.float32)

    # ---- image2token_embeddings ---------------------------------------
    def image2token_embeddings(self, images):
        B = images.shape[0]
        x = images.reshape(B, -1).astype(jnp.float32)             # (B, C*H*W)
        # encoder linear + Linear->Tanh->Linear fused in one kernel
        mapped = fused_vision_mlp(x, self.enc_w, self.enc_b,
                                  self.mlp_w1, self.mlp_b1,
                                  self.mlp_w2, self.mlp_b2)       # (B, hidden*5) bf16
        # (the shape[1]==257 CLS-token drop does not apply to the pooled stand-in)
        if mapped.shape[-1] != self.hidden_size:
            mapped = mapped.reshape(-1, PREFIX_LENGTH, self.hidden_size)
        return mapped                                             # (B, 5, hidden)

    # ---- text2tokens ----------------------------------------------------
    def text2tokens(self, tokens):
        # TODO(synk): string tokenization (HF tokenizer) has no Pallas equivalent;
        # captions are supplied as integer token ids directly.
        tokens = tokens.astype(jnp.int32)
        tokens_embeds = jnp.take(self.wte, tokens, axis=0)        # (B, T, hidden) bf16
        return tokens, tokens_embeds

    # ---- tokens2output --------------------------------------------------
    def tokens2output(self, mapped_embeddings, tokens, tokens_embeds):
        B, P, Hd = mapped_embeddings.shape
        inputs_embeds = jnp.concatenate(
            [mapped_embeddings, tokens_embeds.astype(mapped_embeddings.dtype)], axis=1)
        labels = jnp.concatenate(
            [jnp.full((B, P), -100, dtype=jnp.int32), tokens], axis=1)  # (B, P+T)
        L = inputs_embeds.shape[1]

        # GPT-style causal shift is pre-applied to the labels so the fused
        # LM-head + cross-entropy kernel never has to slice / re-read logits.
        shifted = jnp.concatenate(
            [labels[:, 1:], jnp.full((B, 1), -100, dtype=jnp.int32)], axis=1)

        logits_flat, loss = fused_lmhead_xent(
            inputs_embeds.reshape(B * L, Hd),
            self.lm_head_w, self.lm_head_b,
            shifted.reshape(B * L))
        logits = logits_flat.reshape(B, L, self.vocab_size)
        return {"loss": loss, "logits": logits}

    # ---- forward --------------------------------------------------------
    def forward(self, images, caption_tokens):
        mapped_embeddings = self.image2token_embeddings(images)
        tokens, tokens_embeds = self.text2tokens(caption_tokens)
        return self.tokens2output(mapped_embeddings, tokens, tokens_embeds)


# ----------------------------------------------------------------------------
if __name__ == "__main__":
    B, C, H, W = 2, 3, 16, 16          # in_dim = 768 (lane-dense)
    EMBED_DIM = 128                    # image_encoder.embed_dim
    HIDDEN = 128                       # language_model.config.hidden_size
    VOCAB = 1024                       # multiple of 128 -> 2 vocab tiles of 512
    T = 8                              # caption length

    key = jax.random.PRNGKey(0)
    k_model, k_img, k_tok = jax.random.split(key, 3)

    model = GenerativeImage2TextPallas(
        k_model, img_shape=(C, H, W), embed_dim=EMBED_DIM,
        hidden_size=HIDDEN, vocab_size=VOCAB,
    )

    images = jax.random.normal(k_img, (B, C, H, W), jnp.float32)     # NCHW
    caption_tokens = jax.random.randint(k_tok, (B, T), 0, VOCAB, jnp.int32)

    fwd = jax.jit(model.forward)
    outputs = fwd(images, caption_tokens)
    jax.block_until_ready(outputs["loss"])
    jax.block_until_ready(outputs["logits"])

    assert outputs["logits"].shape == (B, PREFIX_LENGTH + T, VOCAB)
    assert outputs["loss"].shape == ()
    assert bool(jnp.isfinite(outputs["loss"]))
    print("KERNEL_OK")
</pallas_src>

<mosaic_0001>
module attributes {stable_mosaic.version = 11 : i64} {
  func.func @_vision_mlp_kernel(%arg0: i32, %arg1: memref<8x768xf32, #tpu.memory_space<vmem>>, %arg2: memref<768x128xbf16, #tpu.memory_space<vmem>>, %arg3: memref<1x128xf32, #tpu.memory_space<vmem>>, %arg4: memref<128x320xbf16, #tpu.memory_space<vmem>>, %arg5: memref<1x320xf32, #tpu.memory_space<vmem>>, %arg6: memref<320x640xbf16, #tpu.memory_space<vmem>>, %arg7: memref<1x640xf32, #tpu.memory_space<vmem>>, %arg8: memref<8x640xbf16, #tpu.memory_space<vmem>>) attributes {dimension_semantics = [#tpu.dimension_semantics<parallel>], iteration_bounds = array<i64: 1>, scalar_prefetch = 0 : i64, scratch_operands = 0 : i64, tpu.core_type = #tpu.core_type<tc>, window_params = [{transform_indices = @transform_0, window_bounds = array<i64: 8, 768>}, {pipeline_mode = #tpu.pipeline_mode<synchronous>, transform_indices = @transform_1, window_bounds = array<i64: 768, 128>}, {pipeline_mode = #tpu.pipeline_mode<synchronous>, transform_indices = @transform_2, window_bounds = array<i64: 1, 128>}, {pipeline_mode = #tpu.pipeline_mode<synchronous>, transform_indices = @transform_3, window_bounds = array<i64: 128, 320>}, {pipeline_mode = #tpu.pipeline_mode<synchronous>, transform_indices = @transform_4, window_bounds = array<i64: 1, 320>}, {pipeline_mode = #tpu.pipeline_mode<synchronous>, transform_indices = @transform_5, window_bounds = array<i64: 320, 640>}, {pipeline_mode = #tpu.pipeline_mode<synchronous>, transform_indices = @transform_6, window_bounds = array<i64: 1, 640>}, {transform_indices = @transform_7, window_bounds = array<i64: 8, 640>}]} {
    %c0 = arith.constant 0 : index
    %c0_0 = arith.constant 0 : index
    %0 = vector.load %arg1[%c0, %c0_0] : memref<8x768xf32, #tpu.memory_space<vmem>>, vector<8x768xf32>
    %1 = arith.truncf %0 : vector<8x768xf32> to vector<8x768xbf16>
    %c0_1 = arith.constant 0 : index
    %c0_2 = arith.constant 0 : index
    %2 = vector.load %arg2[%c0_1, %c0_2] : memref<768x128xbf16, #tpu.memory_space<vmem>>, vector<768x128xbf16>
    %cst = arith.constant dense<0.000000e+00> : vector<8x128xf32>
    %3 = tpu.matmul %1, %2, %cst {dimension_numbers = #tpu.dot_dimension_numbers<[1], [0], [0], [1], [0, 0, 1, 1], [], []>} : vector<8x768xbf16>, vector<768x128xbf16>, vector<8x128xf32> -> vector<8x128xf32>
    %c0_3 = arith.constant 0 : index
    %c0_4 = arith.constant 0 : index
    %4 = vector.load %arg3[%c0_3, %c0_4] : memref<1x128xf32, #tpu.memory_space<vmem>>, vector<1x128xf32>
    %5 = vector.broadcast %4 : vector<1x128xf32> to vector<8x128xf32>
    %6 = arith.addf %3, %5 : vector<8x128xf32>
    %7 = arith.truncf %6 : vector<8x128xf32> to vector<8x128xbf16>
    %c0_5 = arith.constant 0 : index
    %c0_6 = arith.constant 0 : index
    %8 = vector.load %arg4[%c0_5, %c0_6] : memref<128x320xbf16, #tpu.memory_space<vmem>>, vector<128x320xbf16>
    %cst_7 = arith.constant dense<0.000000e+00> : vector<8x320xf32>
    %9 = tpu.matmul %7, %8, %cst_7 {dimension_numbers = #tpu.dot_dimension_numbers<[1], [0], [0], [1], [0, 0, 1, 1], [], []>} : vector<8x128xbf16>, vector<128x320xbf16>, vector<8x320xf32> -> vector<8x320xf32>
    %c0_8 = arith.constant 0 : index
    %c0_9 = arith.constant 0 : index
    %10 = vector.load %arg5[%c0_8, %c0_9] : memref<1x320xf32, #tpu.memory_space<vmem>>, vector<1x320xf32>
    %11 = vector.broadcast %10 : vector<1x320xf32> to vector<8x320xf32>
    %12 = arith.addf %9, %11 : vector<8x320xf32>
    %13 = math.tanh %12 : vector<8x320xf32>
    %14 = arith.truncf %13 : vector<8x320xf32> to vector<8x320xbf16>
    %c0_10 = arith.constant 0 : index
    %c0_11 = arith.constant 0 : index
    %15 = vector.load %arg6[%c0_10, %c0_11] : memref<320x640xbf16, #tpu.memory_space<vmem>>, vector<320x640xbf16>
    %cst_12 = arith.constant dense<0.000000e+00> : vector<8x640xf32>
    %16 = tpu.matmul %14, %15, %cst_12 {dimension_numbers = #tpu.dot_dimension_numbers<[1], [0], [0], [1], [0, 0, 1, 1], [], []>} : vector<8x320xbf16>, vector<320x640xbf16>, vector<8x640xf32> -> vector<8x640xf32>
    %c0_13 = arith.constant 0 : index
    %c0_14 = arith.constant 0 : index
    %17 = vector.load %arg7[%c0_13, %c0_14] : memref<1x640xf32, #tpu.memory_space<vmem>>, vector<1x640xf32>
    %18 = vector.broadcast %17 : vector<1x640xf32> to vector<8x640xf32>
    %19 = arith.addf %16, %18 : vector<8x640xf32>
    %20 = arith.truncf %19 : vector<8x640xf32> to vector<8x640xbf16>
    %c0_15 = arith.constant 0 : index
    %c0_16 = arith.constant 0 : index
    %21 = vector.load %arg8[%c0_15, %c0_16] : memref<8x640xbf16, #tpu.memory_space<vmem>>, vector<8x640xbf16>
    tpu.vector_store %arg8[%c0_15, %c0_16], %20 {strides = array<i32>} : memref<8x640xbf16, #tpu.memory_space<vmem>>, vector<8x640xbf16>,
    return
  }
  func.func @transform_0(%arg0: i32) -> (i32, i32) {
    %c0_i32 = arith.constant 0 : i32
    %c0_i32_0 = arith.constant 0 : i32
    return %arg0, %c0_i32 : i32, i32
  }
  func.func @transform_1(%arg0: i32) -> (i32, i32) {
    %c0_i32 = arith.constant 0 : i32
    %c0_i32_0 = arith.constant 0 : i32
    %c0_i32_1 = arith.constant 0 : i32
    return %c0_i32, %c0_i32_0 : i32, i32
  }
  func.func @transform_2(%arg0: i32) -> (i32, i32) {
    %c0_i32 = arith.constant 0 : i32
    %c0_i32_0 = arith.constant 0 : i32
    %c0_i32_1 = arith.constant 0 : i32
    return %c0_i32, %c0_i32_0 : i32, i32
  }
  func.func @transform_3(%arg0: i32) -> (i32, i32) {
    %c0_i32 = arith.constant 0 : i32
    %c0_i32_0 = arith.constant 0 : i32
    %c0_i32_1 = arith.constant 0 : i32
    return %c0_i32, %c0_i32_0 : i32, i32
  }
  func.func @transform_4(%arg0: i32) -> (i32, i32) {
    %c0_i32 = arith.constant 0 : i32
    %c0_i32_0 = arith.constant 0 : i32
    %c0_i32_1 = arith.constant 0 : i32
    return %c0_i32, %c0_i32_0 : i32, i32
  }
  func.func @transform_5(%arg0: i32) -> (i32, i32) {
    %c0_i32 = arith.constant 0 : i32
    %c0_i32_0 = arith.constant 0 : i32
    %c0_i32_1 = arith.constant 0 : i32
    return %c0_i32, %c0_i32_0 : i32, i32
  }
  func.func @transform_6(%arg0: i32) -> (i32, i32) {
    %c0_i32 = arith.constant 0 : i32
    %c0_i32_0 = arith.constant 0 : i32
    %c0_i32_1 = arith.constant 0 : i32
    return %c0_i32, %c0_i32_0 : i32, i32
  }
  func.func @transform_7(%arg0: i32) -> (i32, i32) {
    %c0_i32 = arith.constant 0 : i32
    %c0_i32_0 = arith.constant 0 : i32
    return %arg0, %c0_i32 : i32, i32
  }
}

module attributes {stable_mosaic.version = 11 : i64} {
  func.func @_lmhead_ce_kernel(%arg0: i32, %arg1: i32, %arg2: memref<32x128xbf16, #tpu.memory_space<vmem>>, %arg3: memref<128x512xbf16, #tpu.memory_space<vmem>>, %arg4: memref<1x512xf32, #tpu.memory_space<vmem>>, %arg5: memref<32x1xi32, #tpu.memory_space<vmem>>, %arg6: memref<32x512xbf16, #tpu.memory_space<vmem>>, %arg7: memref<32x1xf32, #tpu.memory_space<vmem>>, %arg8: memref<32x1xf32, #tpu.memory_space<vmem>>, %arg9: memref<32x1xf32, #tpu.memory_space<vmem>>, %arg10: memref<32x1xf32, #tpu.memory_space<vmem>>, %arg11: memref<32x1xf32, #tpu.memory_space<vmem>>) attributes {dimension_semantics = [#tpu.dimension_semantics<parallel>, #tpu.dimension_semantics<arbitrary>], iteration_bounds = array<i64: 1, 2>, scalar_prefetch = 0 : i64, scratch_operands = 3 : i64, tpu.core_type = #tpu.core_type<tc>, window_params = [{transform_indices = @transform_0, window_bounds = array<i64: 32, 128>}, {transform_indices = @transform_1, window_bounds = array<i64: 128, 512>}, {transform_indices = @transform_2, window_bounds = array<i64: 1, 512>}, {transform_indices = @transform_3, window_bounds = array<i64: 32, 1>}, {transform_indices = @transform_4, window_bounds = array<i64: 32, 512>}, {transform_indices = @transform_5, window_bounds = array<i64: 32, 1>}, {transform_indices = @transform_6, window_bounds = array<i64: 32, 1>}]} {
    %c0_i32 = arith.constant 0 : i32
    %0 = arith.cmpi eq, %arg1, %c0_i32 : i32
    %1 = arith.extui %0 : i1 to i32
    %c0_i32_0 = arith.constant 0 : i32
    %2 = arith.cmpi ne, %1, %c0_i32_0 : i32
    scf.if %2 {
      %cst_27 = arith.constant 0xFF800000 : f32
      %44 = vector.broadcast %cst_27 : f32 to vector<32x1xf32>
      %c0_28 = arith.constant 0 : index
      %c0_29 = arith.constant 0 : index
      %45 = vector.load %arg9[%c0_28, %c0_29] : memref<32x1xf32, #tpu.memory_space<vmem>>, vector<32x1xf32>
      tpu.vector_store %arg9[%c0_28, %c0_29], %44 {strides = array<i32>} : memref<32x1xf32, #tpu.memory_space<vmem>>, vector<32x1xf32>,
      %cst_30 = arith.constant 0.000000e+00 : f32
      %46 = vector.broadcast %cst_30 : f32 to vector<32x1xf32>
      %c0_31 = arith.constant 0 : index
      %c0_32 = arith.constant 0 : index
      %47 = vector.load %arg10[%c0_31, %c0_32] : memref<32x1xf32, #tpu.memory_space<vmem>>, vector<32x1xf32>
      tpu.vector_store %arg10[%c0_31, %c0_32], %46 {strides = array<i32>} : memref<32x1xf32, #tpu.memory_space<vmem>>, vector<32x1xf32>,
      %cst_33 = arith.constant 0.000000e+00 : f32
      %48 = vector.broadcast %cst_33 : f32 to vector<32x1xf32>
      %c0_34 = arith.constant 0 : index
      %c0_35 = arith.constant 0 : index
      %49 = vector.load %arg11[%c0_34, %c0_35] : memref<32x1xf32, #tpu.memory_space<vmem>>, vector<32x1xf32>
      tpu.vector_store %arg11[%c0_34, %c0_35], %48 {strides = array<i32>} : memref<32x1xf32, #tpu.memory_space<vmem>>, vector<32x1xf32>,
    } else {
    }
    %c0 = arith.constant 0 : index
    %c0_1 = arith.constant 0 : index
    %3 = vector.load %arg2[%c0, %c0_1] : memref<32x128xbf16, #tpu.memory_space<vmem>>, vector<32x128xbf16>
    %c0_2 = arith.constant 0 : index
    %c0_3 = arith.constant 0 : index
    %4 = vector.load %arg3[%c0_2, %c0_3] : memref<128x512xbf16, #tpu.memory_space<vmem>>, vector<128x512xbf16>
    %cst = arith.constant dense<0.000000e+00> : vector<32x512xf32>
    %5 = tpu.matmul %3, %4, %cst {dimension_numbers = #tpu.dot_dimension_numbers<[1], [0], [0], [1], [0, 0, 1, 1], [], []>} : vector<32x128xbf16>, vector<128x512xbf16>, vector<32x512xf32> -> vector<32x512xf32>
    %c0_4 = arith.constant 0 : index
    %c0_5 = arith.constant 0 : index
    %6 = vector.load %arg4[%c0_4, %c0_5] : memref<1x512xf32, #tpu.memory_space<vmem>>, vector<1x512xf32>
    %7 = vector.broadcast %6 : vector<1x512xf32> to vector<32x512xf32>
    %8 = arith.addf %5, %7 : vector<32x512xf32>
    %9 = arith.truncf %8 : vector<32x512xf32> to vector<32x512xbf16>
    %c0_6 = arith.constant 0 : index
    %c0_7 = arith.constant 0 : index
    %10 = vector.load %arg6[%c0_6, %c0_7] : memref<32x512xbf16, #tpu.memory_space<vmem>>, vector<32x512xbf16>
    tpu.vector_store %arg6[%c0_6, %c0_7], %9 {strides = array<i32>} : memref<32x512xbf16, #tpu.memory_space<vmem>>, vector<32x512xbf16>,
    %c0_8 = arith.constant 0 : index
    %c0_9 = arith.constant 0 : index
    %11 = vector.load %arg5[%c0_8, %c0_9] : memref<32x1xi32, #tpu.memory_space<vmem>>, vector<32x1xi32>
    %c0_10 = arith.constant 0 : index
    %c0_11 = arith.constant 0 : index
    %12 = vector.load %arg9[%c0_10, %c0_11] : memref<32x1xf32, #tpu.memory_space<vmem>>, vector<32x1xf32>
    %cst_12 = arith.constant dense<0xFF800000> : vector<32xf32>
    %13 = vector.multi_reduction <maximumf>, %8, %cst_12 [1] : vector<32x512xf32> to vector<32xf32>
    %14 = vector.shape_cast %13 : vector<32xf32> to vector<32x1xf32>
    %15 = arith.maximumf %12, %14 : vector<32x1xf32>
    %16 = arith.subf %12, %15 : vector<32x1xf32>
    %17 = math.exp %16 : vector<32x1xf32>
    %c0_13 = arith.constant 0 : index
    %c0_14 = arith.constant 0 : index
    %18 = vector.load %arg10[%c0_13, %c0_14] : memref<32x1xf32, #tpu.memory_space<vmem>>, vector<32x1xf32>
    %19 = arith.mulf %18, %17 : vector<32x1xf32>
    %20 = vector.broadcast %15 : vector<32x1xf32> to vector<32x512xf32>
    %21 = arith.subf %8, %20 : vector<32x512xf32>
    %22 = math.exp %21 : vector<32x512xf32>
    %cst_15 = arith.constant dense<0.000000e+00> : vector<32xf32>
    %23 = vector.multi_reduction <add>, %22, %cst_15 [1] : vector<32x512xf32> to vector<32xf32>
    %24 = vector.shape_cast %23 : vector<32xf32> to vector<32x1xf32>
    %25 = arith.addf %19, %24 : vector<32x1xf32>
    %c0_16 = arith.constant 0 : index
    %c0_17 = arith.constant 0 : index
    %26 = vector.load %arg10[%c0_16, %c0_17] : memref<32x1xf32, #tpu.memory_space<vmem>>, vector<32x1xf32>
    tpu.vector_store %arg10[%c0_16, %c0_17], %25 {strides = array<i32>} : memref<32x1xf32, #tpu.memory_space<vmem>>, vector<32x1xf32>,
    %c0_18 = arith.constant 0 : index
    %c0_19 = arith.constant 0 : index
    %27 = vector.load %arg9[%c0_18, %c0_19] : memref<32x1xf32, #tpu.memory_space<vmem>>, vector<32x1xf32>
    tpu.vector_store %arg9[%c0_18, %c0_19], %15 {strides = array<i32>} : memref<32x1xf32, #tpu.memory_space<vmem>>, vector<32x1xf32>,
    %28 = tpu.iota {dimensions = array<i32: 1>} : vector<32x512xi32>
    %c512_i32 = arith.constant 512 : i32
    %29 = arith.muli %arg1, %c512_i32 : i32
    %30 = vector.broadcast %29 : i32 to vector<32x512xi32>
    %31 = arith.addi %28, %30 : vector<32x512xi32>
    %c0_20 = arith.constant 0 : index
    %c0_21 = arith.constant 0 : index
    %32 = vector.load %arg11[%c0_20, %c0_21] : memref<32x1xf32, #tpu.memory_space<vmem>>, vector<32x1xf32>
    %33 = vector.broadcast %11 : vector<32x1xi32> to vector<32x512xi32>
    %34 = arith.cmpi eq, %31, %33 : vector<32x512xi32>
    %cst_22 = arith.constant 0.000000e+00 : f32
    %35 = vector.broadcast %cst_22 : f32 to vector<32x512xf32>
    %36 = arith.select %34, %8, %35 : vector<32x512xi1>, vector<32x512xf32>
    %cst_23 = arith.constant dense<0.000000e+00> : vector<32xf32>
    %37 = vector.multi_reduction <add>, %36, %cst_23 [1] : vector<32x512xf32> to vector<32xf32>
    %38 = vector.shape_cast %37 : vector<32xf32> to vector<32x1xf32>
    %39 = arith.addf %32, %38 : vector<32x1xf32>
    %c0_24 = arith.constant 0 : index
    %c0_25 = arith.constant 0 : index
    %40 = vector.load %arg11[%c0_24, %c0_25] : memref<32x1xf32, #tpu.memory_space<vmem>>, vector<32x1xf32>
    tpu.vector_store %arg11[%c0_24, %c0_25], %39 {strides = array<i32>} : memref<32x1xf32, #tpu.memory_space<vmem>>, vector<32x1xf32>,
    %c1_i32 = arith.constant 1 : i32
    %41 = arith.cmpi eq, %arg1, %c1_i32 : i32
    %42 = arith.extui %41 : i1 to i32
    %c0_i32_26 = arith.constant 0 : i32
    %43 = arith.cmpi ne, %42, %c0_i32_26 : i32
    scf.if %43 {
      %c-100_i32 = arith.constant -100 : i32
      %44 = vector.broadcast %c-100_i32 : i32 to vector<32x1xi32>
      %45 = arith.cmpi ne, %11, %44 : vector<32x1xi32>
      %46 = arith.extui %45 : vector<32x1xi1> to vector<32x1xi32>
      %47 = arith.sitofp %46 : vector<32x1xi32> to vector<32x1xf32>
      %c0_27 = arith.constant 0 : index
      %c0_28 = arith.constant 0 : index
      %48 = vector.load %arg9[%c0_27, %c0_28] : memref<32x1xf32, #tpu.memory_space<vmem>>, vector<32x1xf32>
      %c0_29 = arith.constant 0 : index
      %c0_30 = arith.constant 0 : index
      %49 = vector.load %arg10[%c0_29, %c0_30] : memref<32x1xf32, #tpu.memory_space<vmem>>, vector<32x1xf32>
      %50 = math.log %49 : vector<32x1xf32>
      %51 = arith.addf %48, %50 : vector<32x1xf32>
      %c0_31 = arith.constant 0 : index
      %c0_32 = arith.constant 0 : index
      %52 = vector.load %arg11[%c0_31, %c0_32] : memref<32x1xf32, #tpu.memory_space<vmem>>, vector<32x1xf32>
      %53 = arith.subf %51, %52 : vector<32x1xf32>
      %54 = arith.mulf %47, %53 : vector<32x1xf32>
      %c0_33 = arith.constant 0 : index
      %c0_34 = arith.constant 0 : index
      %55 = vector.load %arg7[%c0_33, %c0_34] : memref<32x1xf32, #tpu.memory_space<vmem>>, vector<32x1xf32>
      tpu.vector_store %arg7[%c0_33, %c0_34], %54 {strides = array<i32>} : memref<32x1xf32, #tpu.memory_space<vmem>>, vector<32x1xf32>,
      %c0_35 = arith.constant 0 : index
      %c0_36 = arith.constant 0 : index
      %56 = vector.load %arg8[%c0_35, %c0_36] : memref<32x1xf32, #tpu.memory_space<vmem>>, vector<32x1xf32>
      tpu.vector_store %arg8[%c0_35, %c0_36], %47 {strides = array<i32>} : memref<32x1xf32, #tpu.memory_space<vmem>>, vector<32x1xf32>,
    } else {
    }
    return
  }
  func.func @transform_0(%arg0: i32, %arg1: i32) -> (i32, i32) {
    %c0_i32 = arith.constant 0 : i32
    %c0_i32_0 = arith.constant 0 : i32
    return %arg0, %c0_i32 : i32, i32
  }
  func.func @transform_1(%arg0: i32, %arg1: i32) -> (i32, i32) {
    %c0_i32 = arith.constant 0 : i32
    %c0_i32_0 = arith.constant 0 : i32
    return %c0_i32, %arg1 : i32, i32
  }
  func.func @transform_2(%arg0: i32, %arg1: i32) -> (i32, i32) {
    %c0_i32 = arith.constant 0 : i32
    %c0_i32_0 = arith.constant 0 : i32
    return %c0_i32, %arg1 : i32, i32
  }
  func.func @transform_3(%arg0: i32, %arg1: i32) -> (i32, i32) {
    %c0_i32 = arith.constant 0 : i32
    %c0_i32_0 = arith.constant 0 : i32
    return %arg0, %c0_i32 : i32, i32
  }
  func.func @transform_4(%arg0: i32, %arg1: i32) -> (i32, i32) {
    %c0_i32 = arith.constant 0 : i32
    return %arg0, %arg1 : i32, i32
  }
  func.func @transform_5(%arg0: i32, %arg1: i32) -> (i32, i32) {
    %c0_i32 = arith.constant 0 : i32
    %c0_i32_0 = arith.constant 0 : i32
    return %arg0, %c0_i32 : i32, i32
  }
  func.func @transform_6(%arg0: i32, %arg1: i32) -> (i32, i32) {
    %c0_i32 = arith.constant 0 : i32
    %c0_i32_0 = arith.constant 0 : i32
    return %arg0, %c0_i32 : i32, i32
  }
}

</mosaic_0001>

<llo_original>
// kernel: forward.3
$region0: #{forward.3}
  #allocation0 [shape = 'u32[]', space=smem, size = 0x4, offset = 0x4, fixed_abs, tag = 'smem constant byte address 0x4 - core index']
  #allocation1 [shape = 'u32[144,128]{1,0:T(1,128)}', space=vmem, size = 0x12000, scoped, tag = 'internal scratch']
  #allocation2 [shape = 'f32[32,1]{1,0:T(8,128)}', space=vmem, size = 0x4000, scoped, tag = 'scratch operand']
  #allocation3 [shape = 'f32[32,1]{1,0:T(8,128)}', space=vmem, size = 0x4000, scoped, tag = 'scratch operand']
  #allocation4 [shape = 'f32[32,1]{1,0:T(8,128)}', space=vmem, size = 0x4000, scoped, tag = 'scratch operand']
  %s0 = inlined_call_operand.hbm [shape: bf16[32,128], index: 0, kind: input, shape index: {}]
  %s1 = inlined_call_operand.hbm [shape: bf16[128,1024], index: 1, kind: input, shape index: {}]
  %s2 = inlined_call_operand.hbm [shape: f32[1,1024], index: 2, kind: input, shape index: {}]
  %s3 = inlined_call_operand.hbm [shape: s32[32,1], index: 3, kind: input, shape index: {}]
  %s4 = inlined_call_operand.hbm [shape: bf16[32,1024], index: 4, kind: output, shape index: {0}]
  %s5 = inlined_call_operand.hbm [shape: f32[32,1], index: 5, kind: output, shape index: {1}]
  %s6 = inlined_call_operand.hbm [shape: f32[32,1], index: 6, kind: output, shape index: {2}]
  %7 = xla_tuple %s4, %s5, %s6
  %s8 = sld [smem:[#allocation0]]
  $region89: #{forward.3} parent=0
    _
  %s10 = ssub.s32 1, %s8
  %s11 = scalar_select 0, %s10, %s8
  $region1: #{forward.3} parent=0
    #allocation5 [shape = 'u8[8192]{0}', space=vmem, size = 0x2000, scoped, tag = 'input window, operand 0, single buffered']
    #allocation6 [shape = 's32[2]{0}', space=sflag, size = 0x8, scoped, tag = 'scoped memory for forward.3']
    #allocation7 [shape = 's32[2]{0}', space=sflag, size = 0x8, scoped, tag = 'scoped memory for forward.3']
    #allocation8 [shape = 'u8[262144]{0}', space=vmem, size = 0x40000, scoped, tag = 'input window, operand 1']
    #allocation9 [shape = 's32[2]{0}', space=sflag, size = 0x8, scoped, tag = 'scoped memory for forward.3']
    #allocation10 [shape = 'u8[4096]{0}', space=vmem, size = 0x1000, scoped, tag = 'input window, operand 2']
    #allocation11 [shape = 'u8[16384]{0}', space=vmem, size = 0x4000, scoped, tag = 'input window, operand 3, single buffered']
    #allocation12 [shape = 's32[1]{0}', space=sflag, size = 0x4, scoped, tag = 'scoped memory for forward.3']
    #allocation13 [shape = 'u8[65536]{0}', space=vmem, size = 0x10000, scoped, tag = 'output window, operand 0']
    #allocation14 [shape = 'u8[16384]{0}', space=vmem, size = 0x4000, scoped, tag = 'output window, operand 1, single buffered']
    #allocation15 [shape = 's32[1]{0}', space=sflag, size = 0x4, scoped, tag = 'scoped memory for forward.3']
    #allocation16 [shape = 'u8[16384]{0}', space=vmem, size = 0x4000, scoped, tag = 'output window, operand 2, single buffered']
    %12 = vsyncpa [#allocation6], 0
    %13 = vsyncpa [#allocation9], 0
    %s14 = scalar_lea.sflag [#allocation9], 1
    %15 = vsyncpa %s14, 0
    %16 = vsyncpa [#allocation12], 0
    %17 = vsyncpa [#allocation7], 0
    %s18 = scalar_lea.sflag [#allocation7], 1
    %19 = vsyncpa %s18, 0
    %20 = vsyncpa [#allocation15], 0
    loop: start=0, step=1, limit=4
    $region2: #{forward.3} parent=1 // loop_pre_header
      _
    $region3: #{forward.3} parent=1 // loop_header
      %s22 = sphi 0, %s26
      %p23 = scmp.ge.s32.totalorder %s22, 4
      %s29 = sphi 0, %s41
      %s30 = sphi 0, %s37
      %s31 = sphi 0, %s29
      %s32 = sphi 0, %s30
      %s33 = sphi 0, %s31
      %s34 = sphi 0, %s32
      %s44 = sphi 0, %s46
      %s47 = sphi 0, %s44
      %s48 = sphi 0, %s47
      %s64 = sphi 0, %s48
      %s70 = sphi 0, %s72
      %s73 = sphi 0, %s70
      %s74 = sphi 0, %s73
      %s90 = sphi 0, %s74
      %s96 = sphi 0, %s98
      %s99 = sphi 0, %s96
      %s100 = sphi 0, %s99
      %s116 = sphi 0, %s100
      %s122 = sphi 0, %s124
      %s125 = sphi 0, %s122
      %s126 = sphi 0, %s125
      %s142 = sphi 0, %s126
      %s150 = sphi 0, %s152
      %s153 = sphi 0, %s150
      %s154 = sphi 0, %s153
      %s170 = sphi 0, %s154
      %s176 = sphi 0, %s178
      %s179 = sphi 0, %s176
      %s180 = sphi 0, %s179
      %s196 = sphi 0, %s180
      %s202 = sphi 0, %s204
      %s205 = sphi 0, %s202
      %s206 = sphi 0, %s205
      %s222 = sphi 0, %s206
    $region4: #{forward.3} parent=1 // loop_header_branch
      %25 = sbr.rel (%p23) target = $region8
    $region5: #{forward.3} parent=1 // loop_body
      %s27 = ssub.s32 %s22, 1
      %s28 = ssub.s32 %s22, 2
      %s35 = sadd.s32 1, %s30
      %p36 = scmp.ge.s32.totalorder %s35, 2
      %s37 = scalar_select %p36, 0, %s35
      %s38 = sadd.s32 1, %s29
      %s39 = scalar_select %p36, %s38, %s29
      %p40 = scmp.ge.s32.totalorder %s39, 1
      %s41 = scalar_select %p40, 0, %s39
      %s42 = ssub.s32 %s29, %s41
      %p43 = scmp.eq.s32.totalorder %s42, 0
      %s45 = sadd.s32 %s44, 1
      %s46 = scalar_select %p43, %s44, %s45
      %p49 = pneg %p43
      %p50 = scmp.eq.s32.totalorder %s22, 1
      %p51 = por %p49, %p50
      %p52 = scmp.ne.s32.totalorder %s44, %s47
      %p53 = scmp.eq.s32.totalorder %s22, 0
      %p54 = por %p52, %p53
      %p55 = scmp.ne.s32.totalorder %s44, %s47
      %p56 = scmp.eq.s32.totalorder %s27, 1
      %p57 = por %p55, %p56
      %p58 = scmp.ne.s32.totalorder %s47, %s48
      %p59 = scmp.eq.s32.totalorder %s27, 0
      %p60 = por %p58, %p59
      %p61 = scmp.ne.s32.totalorder %s47, %s48
      %p62 = scmp.eq.s32.totalorder %s28, 1
      %p63 = por %p61, %p62
      %p65 = scmp.ne.s32.totalorder %s48, %s64
      %p66 = scmp.eq.s32.totalorder %s28, 0
      %p67 = por %p65, %p66
      %s68 = ssub.s32 %s30, %s37
      %p69 = scmp.eq.s32.totalorder %s68, 0
      %s71 = sadd.s32 %s70, 1
      %s72 = scalar_select %p69, %s70, %s71
      %p75 = pneg %p69
      %p76 = scmp.eq.s32.totalorder %s22, 1
      %p77 = por %p75, %p76
      %p78 = scmp.ne.s32.totalorder %s70, %s73
      %p79 = scmp.eq.s32.totalorder %s22, 0
      %p80 = por %p78, %p79
      %p81 = scmp.ne.s32.totalorder %s70, %s73
      %p82 = scmp.eq.s32.totalorder %s27, 1
      %p83 = por %p81, %p82
      %p84 = scmp.ne.s32.totalorder %s73, %s74
      %p85 = scmp.eq.s32.totalorder %s27, 0
      %p86 = por %p84, %p85
      %p87 = scmp.ne.s32.totalorder %s73, %s74
      %p88 = scmp.eq.s32.totalorder %s28, 1
      %p89 = por %p87, %p88
      %p91 = scmp.ne.s32.totalorder %s74, %s90
      %p92 = scmp.eq.s32.totalorder %s28, 0
      %p93 = por %p91, %p92
      %s94 = ssub.s32 %s30, %s37
      %p95 = scmp.eq.s32.totalorder %s94, 0
      %s97 = sadd.s32 %s96, 1
      %s98 = scalar_select %p95, %s96, %s97
      %p101 = pneg %p95
      %p102 = scmp.eq.s32.totalorder %s22, 1
      %p103 = por %p101, %p102
      %p104 = scmp.ne.s32.totalorder %s96, %s99
      %p105 = scmp.eq.s32.totalorder %s22, 0
      %p106 = por %p104, %p105
      %p107 = scmp.ne.s32.totalorder %s96, %s99
      %p108 = scmp.eq.s32.totalorder %s27, 1
      %p109 = por %p107, %p108
      %p110 = scmp.ne.s32.totalorder %s99, %s100
      %p111 = scmp.eq.s32.totalorder %s27, 0
      %p112 = por %p110, %p111
      %p113 = scmp.ne.s32.totalorder %s99, %s100
      %p114 = scmp.eq.s32.totalorder %s28, 1
      %p115 = por %p113, %p114
      %p117 = scmp.ne.s32.totalorder %s100, %s116
      %p118 = scmp.eq.s32.totalorder %s28, 0
      %p119 = por %p117, %p118
      %s120 = ssub.s32 %s29, %s41
      %p121 = scmp.eq.s32.totalorder %s120, 0
      %s123 = sadd.s32 %s122, 1
      %s124 = scalar_select %p121, %s122, %s123
      %p127 = pneg %p121
      %p128 = scmp.eq.s32.totalorder %s22, 1
      %p129 = por %p127, %p128
      %p130 = scmp.ne.s32.totalorder %s122, %s125
      %p131 = scmp.eq.s32.totalorder %s22, 0
      %p132 = por %p130, %p131
      %p133 = scmp.ne.s32.totalorder %s122, %s125
      %p134 = scmp.eq.s32.totalorder %s27, 1
      %p135 = por %p133, %p134
      %p136 = scmp.ne.s32.totalorder %s125, %s126
      %p137 = scmp.eq.s32.totalorder %s27, 0
      %p138 = por %p136, %p137
      %p139 = scmp.ne.s32.totalorder %s125, %s126
      %p140 = scmp.eq.s32.totalorder %s28, 1
      %p141 = por %p139, %p140
      %p143 = scmp.ne.s32.totalorder %s126, %s142
      %p144 = scmp.eq.s32.totalorder %s28, 0
      %p145 = por %p143, %p144
      %s146 = ssub.s32 %s29, %s41
      %s147 = ssub.s32 %s30, %s37
      %s148 = sor.u32 %s146, %s147
      %p149 = scmp.eq.s32.totalorder %s148, 0
      %s151 = sadd.s32 %s150, 1
      %s152 = scalar_select %p149, %s150, %s151
      %p155 = pneg %p149
      %p156 = scmp.eq.s32.totalorder %s22, 1
      %p157 = por %p155, %p156
      %p158 = scmp.ne.s32.totalorder %s150, %s153
      %p159 = scmp.eq.s32.totalorder %s22, 0
      %p160 = por %p158, %p159
      %p161 = scmp.ne.s32.totalorder %s150, %s153
      %p162 = scmp.eq.s32.totalorder %s27, 1
      %p163 = por %p161, %p162
      %p164 = scmp.ne.s32.totalorder %s153, %s154
      %p165 = scmp.eq.s32.totalorder %s27, 0
      %p166 = por %p164, %p165
      %p167 = scmp.ne.s32.totalorder %s153, %s154
      %p168 = scmp.eq.s32.totalorder %s28, 1
      %p169 = por %p167, %p168
      %p171 = scmp.ne.s32.totalorder %s154, %s170
      %p172 = scmp.eq.s32.totalorder %s28, 0
      %p173 = por %p171, %p172
      %s174 = ssub.s32 %s29, %s41
      %p175 = scmp.eq.s32.totalorder %s174, 0
      %s177 = sadd.s32 %s176, 1
      %s178 = scalar_select %p175, %s176, %s177
      %p181 = pneg %p175
      %p182 = scmp.eq.s32.totalorder %s22, 1
      %p183 = por %p181, %p182
      %p184 = scmp.ne.s32.totalorder %s176, %s179
      %p185 = scmp.eq.s32.totalorder %s22, 0
      %p186 = por %p184, %p185
      %p187 = scmp.ne.s32.totalorder %s176, %s179
      %p188 = scmp.eq.s32.totalorder %s27, 1
      %p189 = por %p187, %p188
      %p190 = scmp.ne.s32.totalorder %s179, %s180
      %p191 = scmp.eq.s32.totalorder %s27, 0
      %p192 = por %p190, %p191
      %p193 = scmp.ne.s32.totalorder %s179, %s180
      %p194 = scmp.eq.s32.totalorder %s28, 1
      %p195 = por %p193, %p194
      %p197 = scmp.ne.s32.totalorder %s180, %s196
      %p198 = scmp.eq.s32.totalorder %s28, 0
      %p199 = por %p197, %p198
      %s200 = ssub.s32 %s29, %s41
      %p201 = scmp.eq.s32.totalorder %s200, 0
      %s203 = sadd.s32 %s202, 1
      %s204 = scalar_select %p201, %s202, %s203
      %p207 = pneg %p201
      %p208 = scmp.eq.s32.totalorder %s22, 1
      %p209 = por %p207, %p208
      %p210 = scmp.ne.s32.totalorder %s202, %s205
      %p211 = scmp.eq.s32.totalorder %s22, 0
      %p212 = por %p210, %p211
      %p213 = scmp.ne.s32.totalorder %s202, %s205
      %p214 = scmp.eq.s32.totalorder %s27, 1
      %p215 = por %p213, %p214
      %p216 = scmp.ne.s32.totalorder %s205, %s206
      %p217 = scmp.eq.s32.totalorder %s27, 0
      %p218 = por %p216, %p217
      %p219 = scmp.ne.s32.totalorder %s205, %s206
      %p220 = scmp.eq.s32.totalorder %s28, 1
      %p221 = por %p219, %p220
      %p223 = scmp.ne.s32.totalorder %s206, %s222
      %p224 = scmp.eq.s32.totalorder %s28, 0
      %p225 = por %p223, %p224
      %p226 = scmp.le.s32.totalorder 1, %s22
      %p227 = scmp.lt.s32.totalorder %s22, 3
      %p228 = pnand %p226, %p227
      %p229 = pneg %p228
      // Predicated region
      $region9: #{forward.3} parent=5 // pred_check
        _
      $region10: #{forward.3} parent=5 // pred_check_branch
        %231 = sbr.rel (%p228) target = $region12
      $region11: #{forward.3} parent=5 // pred_region
        %s232 = ssub.s32 %s22, 1
        // Predicated region
        $region13: #{forward.3} parent=11 // pred_check
          %p233 = pneg %p60
        $region14: #{forward.3} parent=11 // pred_check_branch
          %235 = sbr.rel (%p233) target = $region16
        $region15: #{forward.3} parent=11 // pred_region
          %s236 = smul.u32 4, %s31
          %s238 = ssub.s32 256, 256
          %239 = vsyncadd [#allocation6], %s238
          %s240 = smul.addr %s236, 64
          %s241 = scalar_lea.hbm %s0, %s240
          %s242 = sshll.u32 [#allocation5], 4
          %s243 = int_to_ptr.vmem [resolvable:$true] %s242
          %248 = dma.hbm_to_vmem [thread:$0]  %s241, 256, %s243, [#allocation6], 64, 64, 4
        $region16: #{forward.3} parent=11 // pred_fallthru
          _
        // Predicated region
        $region17: #{forward.3} parent=11 // pred_check
          %p249 = pneg %p138
        $region18: #{forward.3} parent=11 // pred_check_branch
          %251 = sbr.rel (%p249) target = $region20
        $region19: #{forward.3} parent=11 // pred_region
          %s252 = smul.u32 4, %s31
          %s254 = ssub.s32 512, 512
          %255 = vsyncadd [#allocation12], %s254
          %s256 = smul.addr %s252, 128
          %s257 = scalar_lea.hbm %s3, %s256
          %s258 = sshll.u32 [#allocation11], 4
          %s259 = int_to_ptr.vmem [resolvable:$true] %s258
          %264 = dma.hbm_to_vmem [thread:$0]  %s257, 512, %s259, [#allocation12], 128, 128, 8
        $region20: #{forward.3} parent=11 // pred_fallthru
          _
      $region12: #{forward.3} parent=5 // pred_fallthru
        _
      %p265 = scmp.lt.s32.totalorder %s22, 2
      // Predicated region
      $region21: #{forward.3} parent=5 // pred_check
        %p266 = pneg %p265
      $region22: #{forward.3} parent=5 // pred_check_branch
        %268 = sbr.rel (%p266) target = $region24
      $region23: #{forward.3} parent=5 // pred_region
        // Predicated region
        $region25: #{forward.3} parent=23 // pred_check
          %p269 = pneg %p80
        $region26: #{forward.3} parent=23 // pred_check_branch
          %271 = sbr.rel (%p269) target = $region28
        $region27: #{forward.3} parent=23 // pred_region
          %s272 = sand.u32 %s22, 1
          %s273 = scalar_lea.sflag [#allocation9], %s272
          %s274 = sand.u32 %s70, 1
          %s275 = smul.addr %s274, 256
          %s276 = scalar_lea.vmem [#allocation8], %s275
          %s277 = smul.u32 4, %s30
          %s279 = ssub.s32 4096, 4096
          %280 = vsyncadd %s273, %s279
          %s281 = smul.addr %s277, 64
          %s282 = scalar_lea.hbm %s1, %s281
          %s283 = sshll.u32 %s276, 4
          %s284 = int_to_ptr.vmem [resolvable:$true] %s283
          %289 = dma.hbm_to_vmem [thread:$0]  %s282, 4096, %s284, %s273, 512, 256, 16
        $region28: #{forward.3} parent=23 // pred_fallthru
          _
        // Predicated region
        $region29: #{forward.3} parent=23 // pred_check
          %p290 = pneg %p106
        $region30: #{forward.3} parent=23 // pred_check_branch
          %292 = sbr.rel (%p290) target = $region32
        $region31: #{forward.3} parent=23 // pred_region
          %s293 = sand.u32 %s22, 1
          %s294 = scalar_lea.sflag [#allocation9], %s293
          %s295 = sand.u32 %s96, 1
          %s296 = smul.addr %s295, 4
          %s297 = scalar_lea.vmem [#allocation10], %s296
          %s298 = smul.u32 4, %s30
          %s300 = ssub.s32 64, 64
          %301 = vsyncadd %s294, %s300
          %s302 = smul.addr %s298, 16
          %s303 = scalar_lea.hbm %s2, %s302
          %s305 = sshll.u32 %s297, 4
          %s306 = int_to_ptr.vmem [resolvable:$true] %s305
          %308 = dma.hbm_to_vmem [thread:$0]  %s303, 64, %s306, %s294
        $region32: #{forward.3} parent=23 // pred_fallthru
          _
      $region24: #{forward.3} parent=5 // pred_fallthru
        _
      %p309 = scmp.le.s32.totalorder 1, %s22
      %p310 = scmp.lt.s32.totalorder %s22, 3
      %p311 = pnand %p309, %p310
      %p312 = pneg %p311
      // Predicated region
      $region33: #{forward.3} parent=5 // pred_check
        _
      $region34: #{forward.3} parent=5 // pred_check_branch
        %314 = sbr.rel (%p311) target = $region36
      $region35: #{forward.3} parent=5 // pred_region
        %s315 = ssub.s32 %s22, 1
        // Predicated region
        $region37: #{forward.3} parent=35 // pred_check
          %p316 = pneg %p60
        $region38: #{forward.3} parent=35 // pred_check_branch
          %318 = sbr.rel (%p316) target = $region40
        $region39: #{forward.3} parent=35 // pred_region
          %319 = dma.done [#allocation6], 256
        $region40: #{forward.3} parent=35 // pred_fallthru
          _
        %s320 = sand.u32 %s27, 1
        %s321 = scalar_lea.sflag [#allocation9], %s320
        %s322 = sand.u32 %s73, 1
        %s323 = smul.addr %s322, 256
        %s324 = scalar_lea.vmem [#allocation8], %s323
        // Predicated region
        $region41: #{forward.3} parent=35 // pred_check
          %p325 = pneg %p86
        $region42: #{forward.3} parent=35 // pred_check_branch
          %327 = sbr.rel (%p325) target = $region44
        $region43: #{forward.3} parent=35 // pred_region
          %328 = dma.done %s321, 4096
        $region44: #{forward.3} parent=35 // pred_fallthru
          _
        %s329 = sand.u32 %s27, 1
        %s330 = scalar_lea.sflag [#allocation9], %s329
        %s331 = sand.u32 %s99, 1
        %s332 = smul.addr %s331, 4
        %s333 = scalar_lea.vmem [#allocation10], %s332
        // Predicated region
        $region45: #{forward.3} parent=35 // pred_check
          %p334 = pneg %p112
        $region46: #{forward.3} parent=35 // pred_check_branch
          %336 = sbr.rel (%p334) target = $region48
        $region47: #{forward.3} parent=35 // pred_region
          %337 = dma.done %s330, 64
        $region48: #{forward.3} parent=35 // pred_fallthru
          _
        // Predicated region
        $region49: #{forward.3} parent=35 // pred_check
          %p338 = pneg %p138
        $region50: #{forward.3} parent=35 // pred_check_branch
          %340 = sbr.rel (%p338) target = $region52
        $region51: #{forward.3} parent=35 // pred_region
          %341 = dma.done [#allocation12], 512
        $region52: #{forward.3} parent=35 // pred_fallthru
          _
        %p342 = pneg %p60
        %p343 = pneg %p57
        %s344 = sand.u32 %s27, 1
        %s345 = scalar_lea.sflag [#allocation9], %s344
        %s346 = sand.u32 %s73, 1
        %s347 = smul.addr %s346, 256
        %s348 = scalar_lea.vmem [#allocation8], %s347
        %p349 = pneg %p86
        %p350 = pneg %p83
        %s351 = sand.u32 %s27, 1
        %s352 = scalar_lea.sflag [#allocation9], %s351
        %s353 = sand.u32 %s99, 1
        %s354 = smul.addr %s353, 4
        %s355 = scalar_lea.vmem [#allocation10], %s354
        %p356 = pneg %p112
        %p357 = pneg %p109
        %p358 = pneg %p138
        %p359 = pneg %p135
        %p360 = pneg %p166
        %p361 = pneg %p163
        %s362 = sand.u32 %s153, 1
        %s363 = scalar_lea.sflag [#allocation7], %s362
        %s364 = sand.u32 %s153, 1
        %s365 = smul.addr %s364, 64
        %s366 = scalar_lea.vmem [#allocation13], %s365
        %p367 = pneg %p192
        %p368 = pneg %p189
        %p369 = pneg %p218
        %p370 = pneg %p215
        %s371 = smul.u32 4, %s31
        %s372 = smul.u32 4, %s32
        %s373 = smul.u32 4, %s32
        %s374 = smul.u32 4, %s31
        %s375 = smul.u32 4, %s31
        %s376 = smul.u32 4, %s32
        %s377 = smul.u32 4, %s31
        %s378 = smul.u32 4, %s31
        %p380 = scmp.eq.s32.totalorder %s32, 0
        // Predicated region
        $region53: #{forward.3} parent=35 // pred_check
          %p381 = pneg %p380
        $region54: #{forward.3} parent=35 // pred_check_branch
          %383 = sbr.rel (%p381) target = $region56
        $region55: #{forward.3} parent=35 // pred_region
          %vm384 = vcmask 7168
          %385 = vst.msk [vmem:[#allocation2] sm:$0xff] %vm384, -inf
          %386 = vst.msk [vmem:[#allocation2 + $0x8] sm:$0xff] %vm384, -inf
          %387 = vst.msk [vmem:[#allocation2 + $0x10] sm:$0xff] %vm384, -inf
          %388 = vst.msk [vmem:[#allocation2 + $0x18] sm:$0xff] %vm384, -inf
          %389 = vst.msk [vmem:[#allocation3] sm:$0xff] %vm384, 0.0
          %390 = vst.msk [vmem:[#allocation3 + $0x8] sm:$0xff] %vm384, 0.0
          %391 = vst.msk [vmem:[#allocation3 + $0x10] sm:$0xff] %vm384, 0.0
          %392 = vst.msk [vmem:[#allocation3 + $0x18] sm:$0xff] %vm384, 0.0
          %393 = vst.msk [vmem:[#allocation4] sm:$0xff] %vm384, 0.0
          %394 = vst.msk [vmem:[#allocation4 + $0x8] sm:$0xff] %vm384, 0.0
          %395 = vst.msk [vmem:[#allocation4 + $0x10] sm:$0xff] %vm384, 0.0
          %396 = vst.msk [vmem:[#allocation4 + $0x18] sm:$0xff] %vm384, 0.0
        $region56: #{forward.3} parent=35 // pred_fallthru
          _
        %v397 = vld [vmem:[#allocation5] sm:$0xf]
        %v398 = vld [vmem:[#allocation5 + $0x4] sm:$0xf]
        %v399 = vld [vmem:[#allocation5 + $0x8] sm:$0xf]
        %v400 = vld [vmem:[#allocation5 + $0xc] sm:$0xf]
        %v401 = vld [vmem:[%s324] sm:$0xff]
        %v402 = vld [vmem:[%s324 + $0x8] sm:$0xff]
        %v403 = vld [vmem:[%s324 + $0x10] sm:$0xff]
        %v404 = vld [vmem:[%s324 + $0x18] sm:$0xff]
        %v405 = vld [vmem:[%s324 + $0x20] sm:$0xff]
        %v406 = vld [vmem:[%s324 + $0x28] sm:$0xff]
        %v407 = vld [vmem:[%s324 + $0x30] sm:$0xff]
        %v408 = vld [vmem:[%s324 + $0x38] sm:$0xff]
        %v409 = vld [vmem:[%s324 + $0x40] sm:$0xff]
        %v410 = vld [vmem:[%s324 + $0x48] sm:$0xff]
        %v411 = vld [vmem:[%s324 + $0x50] sm:$0xff]
        %v412 = vld [vmem:[%s324 + $0x58] sm:$0xff]
        %v413 = vld [vmem:[%s324 + $0x60] sm:$0xff]
        %v414 = vld [vmem:[%s324 + $0x68] sm:$0xff]
        %v415 = vld [vmem:[%s324 + $0x70] sm:$0xff]
        %v416 = vld [vmem:[%s324 + $0x78] sm:$0xff]
        %v417 = vld [vmem:[%s324 + $0x80] sm:$0xff]
        %v418 = vld [vmem:[%s324 + $0x88] sm:$0xff]
        %v419 = vld [vmem:[%s324 + $0x90] sm:$0xff]
        %v420 = vld [vmem:[%s324 + $0x98] sm:$0xff]
        %v421 = vld [vmem:[%s324 + $0xa0] sm:$0xff]
        %v422 = vld [vmem:[%s324 + $0xa8] sm:$0xff]
        %v423 = vld [vmem:[%s324 + $0xb0] sm:$0xff]
        %v424 = vld [vmem:[%s324 + $0xb8] sm:$0xff]
        %v425 = vld [vmem:[%s324 + $0xc0] sm:$0xff]
        %v426 = vld [vmem:[%s324 + $0xc8] sm:$0xff]
        %v427 = vld [vmem:[%s324 + $0xd0] sm:$0xff]
        %v428 = vld [vmem:[%s324 + $0xd8] sm:$0xff]
        %v429 = vld [vmem:[%s324 + $0xe0] sm:$0xff]
        %v430 = vld [vmem:[%s324 + $0xe8] sm:$0xff]
        %v431 = vld [vmem:[%s324 + $0xf0] sm:$0xff]
        %v432 = vld [vmem:[%s324 + $0xf8] sm:$0xff]
        %v433 = vld [vmem:[%s333] sm:$0xf]
        %v435 = vlaneseq
        %v436 = vshrl.u32 %v435, 7
        %v437 = vsub.s32 0, %v436
        %v438 = vrot.slane %v433, %v437
        %v439 = vlaneseq
        %v440 = vshrl.u32 %v439, 7
        %v441 = vsub.s32 1, %v440
        %v442 = vrot.slane %v433, %v441
        %v443 = vlaneseq
        %v444 = vshrl.u32 %v443, 7
        %v445 = vsub.s32 2, %v444
        %v446 = vrot.slane %v433, %v445
        %v447 = vlaneseq
        %v448 = vshrl.u32 %v447, 7
        %v449 = vsub.s32 3, %v448
        %v450 = vrot.slane %v433, %v449
        %v459 = vunpack.c.l.b16 %v397
        %v460 = vunpack.c.l.b16 %v398
        %v461 = vunpack.c.l.b16 %v399
        %v462 = vunpack.c.l.b16 %v400
        %v463 = vpack.c.b16 %v460, %v459
        %v464 = vpack.c.b16 %v462, %v461
        %v499 = vunpack.c.l.b16 %v401
        %v500 = vunpack.c.h.b16 %v401
        %v501 = vunpack.c.l.b16 %v402
        %v502 = vunpack.c.h.b16 %v402
        %v503 = vunpack.c.l.b16 %v403
        %v504 = vunpack.c.h.b16 %v403
        %v505 = vunpack.c.l.b16 %v404
        %v506 = vunpack.c.h.b16 %v404
        %v507 = vunpack.c.l.b16 %v405
        %v508 = vunpack.c.h.b16 %v405
        %v509 = vunpack.c.l.b16 %v406
        %v510 = vunpack.c.h.b16 %v406
        %v511 = vunpack.c.l.b16 %v407
        %v512 = vunpack.c.h.b16 %v407
        %v513 = vunpack.c.l.b16 %v408
        %v514 = vunpack.c.h.b16 %v408
        %v515 = vunpack.c.l.b16 %v409
        %v516 = vunpack.c.h.b16 %v409
        %v517 = vunpack.c.l.b16 %v410
        %v518 = vunpack.c.h.b16 %v410
        %v519 = vunpack.c.l.b16 %v411
        %v520 = vunpack.c.h.b16 %v411
        %v521 = vunpack.c.l.b16 %v412
        %v522 = vunpack.c.h.b16 %v412
        %v523 = vunpack.c.l.b16 %v413
        %v524 = vunpack.c.h.b16 %v413
        %v525 = vunpack.c.l.b16 %v414
        %v526 = vunpack.c.h.b16 %v414
        %v527 = vunpack.c.l.b16 %v415
        %v528 = vunpack.c.h.b16 %v415
        %v529 = vunpack.c.l.b16 %v416
        %v530 = vunpack.c.h.b16 %v416
        %v531 = vunpack.c.l.b16 %v417
        %v532 = vunpack.c.h.b16 %v417
        %v533 = vunpack.c.l.b16 %v418
        %v534 = vunpack.c.h.b16 %v418
        %v535 = vunpack.c.l.b16 %v419
        %v536 = vunpack.c.h.b16 %v419
        %v537 = vunpack.c.l.b16 %v420
        %v538 = vunpack.c.h.b16 %v420
        %v539 = vunpack.c.l.b16 %v421
        %v540 = vunpack.c.h.b16 %v421
        %v541 = vunpack.c.l.b16 %v422
        %v542 = vunpack.c.h.b16 %v422
        %v543 = vunpack.c.l.b16 %v423
        %v544 = vunpack.c.h.b16 %v423
        %v545 = vunpack.c.l.b16 %v424
        %v546 = vunpack.c.h.b16 %v424
        %v547 = vunpack.c.l.b16 %v425
        %v548 = vunpack.c.h.b16 %v425
        %v549 = vunpack.c.l.b16 %v426
        %v550 = vunpack.c.h.b16 %v426
        %v551 = vunpack.c.l.b16 %v427
        %v552 = vunpack.c.h.b16 %v427
        %v553 = vunpack.c.l.b16 %v428
        %v554 = vunpack.c.h.b16 %v428
        %v555 = vunpack.c.l.b16 %v429
        %v556 = vunpack.c.h.b16 %v429
        %v557 = vunpack.c.l.b16 %v430
        %v558 = vunpack.c.h.b16 %v430
        %v559 = vunpack.c.l.b16 %v431
        %v560 = vunpack.c.h.b16 %v431
        %v561 = vunpack.c.l.b16 %v432
        %v562 = vunpack.c.h.b16 %v432
        %v563 = vpack.c.b16 %v503, %v499
        %v564 = vpack.c.b16 %v504, %v500
        %v565 = vpack.c.b16 %v505, %v501
        %v566 = vpack.c.b16 %v506, %v502
        %v567 = vpack.c.b16 %v511, %v507
        %v568 = vpack.c.b16 %v512, %v508
        %v569 = vpack.c.b16 %v513, %v509
        %v570 = vpack.c.b16 %v514, %v510
        %v571 = vpack.c.b16 %v519, %v515
        %v572 = vpack.c.b16 %v520, %v516
        %v573 = vpack.c.b16 %v521, %v517
        %v574 = vpack.c.b16 %v522, %v518
        %v575 = vpack.c.b16 %v527, %v523
        %v576 = vpack.c.b16 %v528, %v524
        %v577 = vpack.c.b16 %v529, %v525
        %v578 = vpack.c.b16 %v530, %v526
        %v579 = vpack.c.b16 %v535, %v531
        %v580 = vpack.c.b16 %v536, %v532
        %v581 = vpack.c.b16 %v537, %v533
        %v582 = vpack.c.b16 %v538, %v534
        %v583 = vpack.c.b16 %v543, %v539
        %v584 = vpack.c.b16 %v544, %v540
        %v585 = vpack.c.b16 %v545, %v541
        %v586 = vpack.c.b16 %v546, %v542
        %v587 = vpack.c.b16 %v551, %v547
        %v588 = vpack.c.b16 %v552, %v548
        %v589 = vpack.c.b16 %v553, %v549
        %v590 = vpack.c.b16 %v554, %v550
        %v591 = vpack.c.b16 %v559, %v555
        %v592 = vpack.c.b16 %v560, %v556
        %v593 = vpack.c.b16 %v561, %v557
        %v594 = vpack.c.b16 %v562, %v558
        %627 = vmatprep.subr.bf16.mxu0 %v564
        %628 = vmatpush1.bf16.msra.mxu0 %v563
        %629 = vmatprep.subr.bf16.mxu0 %v568
        %630 = vmatpush1.bf16.msra.mxu0 %v567
        %631 = vmatprep.subr.bf16.mxu0 %v572
        %632 = vmatpush1.bf16.msra.mxu0 %v571
        %633 = vmatprep.subr.bf16.mxu0 %v576
        %634 = vmatpush1.bf16.msra.mxu0 %v575
        %635 = vmatprep.subr.bf16.mxu0 %v580
        %636 = vmatpush1.bf16.msra.mxu0 %v579
        %637 = vmatprep.subr.bf16.mxu0 %v584
        %638 = vmatpush1.bf16.msra.mxu0 %v583
        %639 = vmatprep.subr.bf16.mxu0 %v588
        %640 = vmatpush1.bf16.msra.mxu0 %v587
        %641 = vmatprep.subr.bf16.mxu0 %v592
        %642 = vmatpush1.bf16.msra.mxu0 %v591
        %643 = vmatprep.subr.bf16.mxu0 0
        %644 = vmatpush1.bf16.msra.mxu0 0
        %645 = vmatprep.subr.bf16.mxu0 0
        %646 = vmatpush1.bf16.msra.mxu0 0
        %647 = vmatprep.subr.bf16.mxu0 0
        %648 = vmatpush1.bf16.msra.mxu0 0
        %649 = vmatprep.subr.bf16.mxu0 0
        %650 = vmatpush1.bf16.msra.mxu0 0
        %651 = vmatprep.subr.bf16.mxu0 0
        %652 = vmatpush1.bf16.msra.mxu0 0
        %653 = vmatprep.subr.bf16.mxu0 0
        %654 = vmatpush1.bf16.msra.mxu0 0
        %655 = vmatprep.subr.bf16.mxu0 0
        %656 = vmatpush1.bf16.msra.mxu0 0
        %657 = vmatprep.subr.bf16.mxu0 0
        %658 = vmatpush1.bf16.msra.mxu0 0
        %659 = vmatprep.mubr.bf16.mxu0 0
        %660 = vmatmul.mubr.bf16.gmra.mrb[0].mxu0 %v463
        %v661 = vpop.f32.mrb[0].mxu0
        %v662 = vadd.f32 %v438, %v661
        %v663 = vpop.f32.mrb[0].mxu0
        %v664 = vadd.f32 %v442, %v663
        %v665 = vpop.f32.mrb[0].mxu0
        %v666 = vadd.f32 %v438, %v665
        %v667 = vpop.f32.mrb[0].mxu0
        %v668 = vadd.f32 %v442, %v667
        %669 = vmatprep.mubr.bf16.mxu0 0
        %670 = vmatmul.mubr.bf16.gmra.mrb[0].mxu0 %v464
        %v671 = vpop.f32.mrb[0].mxu0
        %v672 = vadd.f32 %v438, %v671
        %v673 = vpop.f32.mrb[0].mxu0
        %v674 = vadd.f32 %v442, %v673
        %v675 = vpop.f32.mrb[0].mxu0
        %v676 = vadd.f32 %v438, %v675
        %v677 = vpop.f32.mrb[0].mxu0
        %v678 = vadd.f32 %v442, %v677
        %679 = vdwg.mxu0
        %680 = vmatprep.subr.bf16.mxu0 %v566
        %681 = vmatpush1.bf16.msra.mxu0 %v565
        %682 = vmatprep.subr.bf16.mxu0 %v570
        %683 = vmatpush1.bf16.msra.mxu0 %v569
        %684 = vmatprep.subr.bf16.mxu0 %v574
        %685 = vmatpush1.bf16.msra.mxu0 %v573
        %686 = vmatprep.subr.bf16.mxu0 %v578
        %687 = vmatpush1.bf16.msra.mxu0 %v577
        %688 = vmatprep.subr.bf16.mxu0 %v582
        %689 = vmatpush1.bf16.msra.mxu0 %v581
        %690 = vmatprep.subr.bf16.mxu0 %v586
        %691 = vmatpush1.bf16.msra.mxu0 %v585
        %692 = vmatprep.subr.bf16.mxu0 %v590
        %693 = vmatpush1.bf16.msra.mxu0 %v589
        %694 = vmatprep.subr.bf16.mxu0 %v594
        %695 = vmatpush1.bf16.msra.mxu0 %v593
        %696 = vmatprep.subr.bf16.mxu0 0
        %697 = vmatpush1.bf16.msra.mxu0 0
        %698 = vmatprep.subr.bf16.mxu0 0
        %699 = vmatpush1.bf16.msra.mxu0 0
        %700 = vmatprep.subr.bf16.mxu0 0
        %701 = vmatpush1.bf16.msra.mxu0 0
        %702 = vmatprep.subr.bf16.mxu0 0
        %703 = vmatpush1.bf16.msra.mxu0 0
        %704 = vmatprep.subr.bf16.mxu0 0
        %705 = vmatpush1.bf16.msra.mxu0 0
        %706 = vmatprep.subr.bf16.mxu0 0
        %707 = vmatpush1.bf16.msra.mxu0 0
        %708 = vmatprep.subr.bf16.mxu0 0
        %709 = vmatpush1.bf16.msra.mxu0 0
        %710 = vmatprep.subr.bf16.mxu0 0
        %711 = vmatpush1.bf16.msra.mxu0 0
        %712 = vmatprep.mubr.bf16.mxu0 0
        %713 = vmatmul.mubr.bf16.gmra.mrb[0].mxu0 %v463
        %v714 = vpop.f32.mrb[0].mxu0
        %v715 = vadd.f32 %v446, %v714
        %v716 = vpop.f32.mrb[0].mxu0
        %v717 = vadd.f32 %v450, %v716
        %v718 = vpop.f32.mrb[0].mxu0
        %v719 = vadd.f32 %v446, %v718
        %v720 = vpop.f32.mrb[0].mxu0
        %v721 = vadd.f32 %v450, %v720
        %722 = vmatprep.mubr.bf16.mxu0 0
        %723 = vmatmul.mubr.bf16.gmra.mrb[0].mxu0 %v464
        %v724 = vpop.f32.mrb[0].mxu0
        %v725 = vadd.f32 %v446, %v724
        %v726 = vpop.f32.mrb[0].mxu0
        %v727 = vadd.f32 %v450, %v726
        %v728 = vpop.f32.mrb[0].mxu0
        %v729 = vadd.f32 %v446, %v728
        %v730 = vpop.f32.mrb[0].mxu0
        %v731 = vadd.f32 %v450, %v730
        %732 = vdwg.mxu0
        %v733 = vpack.c.bf16 %v666, %v662
        %v734 = vpack.c.bf16 %v668, %v664
        %v735 = vpack.c.bf16 %v719, %v715
        %v736 = vpack.c.bf16 %v721, %v717
        %v737 = vpack.c.bf16 %v676, %v672
        %v738 = vpack.c.bf16 %v678, %v674
        %v739 = vpack.c.bf16 %v729, %v725
        %v740 = vpack.c.bf16 %v731, %v727
        %v749 = vunpack.c.l.b16 %v733
        %v750 = vunpack.c.l.b16 %v734
        %v751 = vunpack.c.l.b16 %v735
        %v752 = vunpack.c.l.b16 %v736
        %v753 = vunpack.c.h.b16 %v733
        %v754 = vunpack.c.h.b16 %v734
        %v755 = vunpack.c.h.b16 %v735
        %v756 = vunpack.c.h.b16 %v736
        %v757 = vunpack.c.l.b16 %v737
        %v758 = vunpack.c.l.b16 %v738
        %v759 = vunpack.c.l.b16 %v739
        %v760 = vunpack.c.l.b16 %v740
        %v761 = vunpack.c.h.b16 %v737
        %v762 = vunpack.c.h.b16 %v738
        %v763 = vunpack.c.h.b16 %v739
        %v764 = vunpack.c.h.b16 %v740
        %v765 = vpack.c.b16 %v750, %v749
        %v766 = vpack.c.b16 %v752, %v751
        %v767 = vpack.c.b16 %v754, %v753
        %v768 = vpack.c.b16 %v756, %v755
        %v769 = vpack.c.b16 %v758, %v757
        %v770 = vpack.c.b16 %v760, %v759
        %v771 = vpack.c.b16 %v762, %v761
        %v772 = vpack.c.b16 %v764, %v763
        %781 = vst [vmem:[%s366] sm:$0xff] %v765
        %782 = vst [vmem:[%s366 + $0x8] sm:$0xff] %v766
        %783 = vst [vmem:[%s366 + $0x10] sm:$0xff] %v767
        %784 = vst [vmem:[%s366 + $0x18] sm:$0xff] %v768
        %785 = vst [vmem:[%s366 + $0x20] sm:$0xff] %v769
        %786 = vst [vmem:[%s366 + $0x28] sm:$0xff] %v770
        %787 = vst [vmem:[%s366 + $0x30] sm:$0xff] %v771
        %788 = vst [vmem:[%s366 + $0x38] sm:$0xff] %v772
        %v789 = vld [vmem:[#allocation11] sm:$0xff]
        %v790 = vld [vmem:[#allocation11 + $0x8] sm:$0xff]
        %v791 = vld [vmem:[#allocation11 + $0x10] sm:$0xff]
        %v792 = vld [vmem:[#allocation11 + $0x18] sm:$0xff]
        %v793 = vld [vmem:[#allocation2] sm:$0xff]
        %v794 = vld [vmem:[#allocation2 + $0x8] sm:$0xff]
        %v795 = vld [vmem:[#allocation2 + $0x10] sm:$0xff]
        %v796 = vld [vmem:[#allocation2 + $0x18] sm:$0xff]
        %v797 = vmax.f32 %v662, %v664
        %v798 = vmax.f32 %v797, %v715
        %v799 = vmax.f32 %v798, %v717
        %800 = vmax.xlane.f32.xlu0 %v799
        %v801 = vpop.xlane.xlu0 %800
        %v802 = vmax.f32 %v666, %v668
        %v803 = vmax.f32 %v802, %v719
        %v804 = vmax.f32 %v803, %v721
        %805 = vmax.xlane.f32.xlu0 %v804
        %v806 = vpop.xlane.xlu0 %805
        %v807 = vmax.f32 %v672, %v674
        %v808 = vmax.f32 %v807, %v725
        %v809 = vmax.f32 %v808, %v727
        %810 = vmax.xlane.f32.xlu0 %v809
        %v811 = vpop.xlane.xlu0 %810
        %v812 = vmax.f32 %v676, %v678
        %v813 = vmax.f32 %v812, %v729
        %v814 = vmax.f32 %v813, %v731
        %815 = vmax.xlane.f32.xlu0 %v814
        %v816 = vpop.xlane.xlu0 %815
        %v817 = vmax.f32 %v793, %v801
        %v818 = vmax.f32 %v794, %v806
        %v819 = vmax.f32 %v795, %v811
        %v820 = vmax.f32 %v796, %v816
        %v821 = vsub.f32 %v793, %v817
        %v822 = vsub.f32 %v794, %v818
        %v823 = vsub.f32 %v795, %v819
        %v824 = vsub.f32 %v796, %v820
        %v825 = vmul.f32 %v821, 1.442695
        %v826 = vpow.pop %v825
        %v827 = vmul.f32 %v822, 1.442695
        %v828 = vpow.pop %v827
        %v829 = vmul.f32 %v823, 1.442695
        %v830 = vpow.pop %v829
        %v831 = vmul.f32 %v824, 1.442695
        %v832 = vpow.pop %v831
        %v833 = vld [vmem:[#allocation3] sm:$0xff]
        %v834 = vld [vmem:[#allocation3 + $0x8] sm:$0xff]
        %v835 = vld [vmem:[#allocation3 + $0x10] sm:$0xff]
        %v836 = vld [vmem:[#allocation3 + $0x18] sm:$0xff]
        %v837 = vmul.f32 %v833, %v826
        %v838 = vmul.f32 %v834, %v828
        %v839 = vmul.f32 %v835, %v830
        %v840 = vmul.f32 %v836, %v832
        %842 = vset.pattern.permute.xlu0 0
        %843 = vperm.xlu0 %842, %v817
        %v844 = vpop.permute.xlu0 %843
        %847 = vset.pattern.permute.xlu0 0
        %848 = vperm.xlu0 %847, %v818
        %v849 = vpop.permute.xlu0 %848
        %852 = vset.pattern.permute.xlu0 0
        %853 = vperm.xlu0 %852, %v819
        %v854 = vpop.permute.xlu0 %853
        %857 = vset.pattern.permute.xlu0 0
        %858 = vperm.xlu0 %857, %v820
        %v859 = vpop.permute.xlu0 %858
        %v861 = vsub.f32 %v662, %v844
        %v862 = vsub.f32 %v664, %v844
        %v863 = vsub.f32 %v715, %v844
        %v864 = vsub.f32 %v717, %v844
        %v865 = vsub.f32 %v666, %v849
        %v866 = vsub.f32 %v668, %v849
        %v867 = vsub.f32 %v719, %v849
        %v868 = vsub.f32 %v721, %v849
        %v869 = vsub.f32 %v672, %v854
        %v870 = vsub.f32 %v674, %v854
        %v871 = vsub.f32 %v725, %v854
        %v872 = vsub.f32 %v727, %v854
        %v873 = vsub.f32 %v676, %v859
        %v874 = vsub.f32 %v678, %v859
        %v875 = vsub.f32 %v729, %v859
        %v876 = vsub.f32 %v731, %v859
        %v877 = vmul.f32 %v861, 1.442695
        %v878 = vpow.pop %v877
        %v879 = vmul.f32 %v862, 1.442695
        %v880 = vpow.pop %v879
        %v881 = vmul.f32 %v863, 1.442695
        %v882 = vpow.pop %v881
        %v883 = vmul.f32 %v864, 1.442695
        %v884 = vpow.pop %v883
        %v885 = vmul.f32 %v865, 1.442695
        %v886 = vpow.pop %v885
        %v887 = vmul.f32 %v866, 1.442695
        %v888 = vpow.pop %v887
        %v889 = vmul.f32 %v867, 1.442695
        %v890 = vpow.pop %v889
        %v891 = vmul.f32 %v868, 1.442695
        %v892 = vpow.pop %v891
        %v893 = vmul.f32 %v869, 1.442695
        %v894 = vpow.pop %v893
        %v895 = vmul.f32 %v870, 1.442695
        %v896 = vpow.pop %v895
        %v897 = vmul.f32 %v871, 1.442695
        %v898 = vpow.pop %v897
        %v899 = vmul.f32 %v872, 1.442695
        %v900 = vpow.pop %v899
        %v901 = vmul.f32 %v873, 1.442695
        %v902 = vpow.pop %v901
        %v903 = vmul.f32 %v874, 1.442695
        %v904 = vpow.pop %v903
        %v905 = vmul.f32 %v875, 1.442695
        %v906 = vpow.pop %v905
        %v907 = vmul.f32 %v876, 1.442695
        %v908 = vpow.pop %v907
        %v909 = vadd.f32 %v878, %v880
        %v910 = vadd.f32 %v909, %v882
        %v911 = vadd.f32 %v910, %v884
        %912 = vadd.xlane.f32.xlu0 %v911
        %v913 = vpop.xlane.xlu0 %912
        %v914 = vadd.f32 %v886, %v888
        %v915 = vadd.f32 %v914, %v890
        %v916 = vadd.f32 %v915, %v892
        %917 = vadd.xlane.f32.xlu0 %v916
        %v918 = vpop.xlane.xlu0 %917
        %v919 = vadd.f32 %v894, %v896
        %v920 = vadd.f32 %v919, %v898
        %v921 = vadd.f32 %v920, %v900
        %922 = vadd.xlane.f32.xlu0 %v921
        %v923 = vpop.xlane.xlu0 %922
        %v924 = vadd.f32 %v902, %v904
        %v925 = vadd.f32 %v924, %v906
        %v926 = vadd.f32 %v925, %v908
        %927 = vadd.xlane.f32.xlu0 %v926
        %v928 = vpop.xlane.xlu0 %927
        %v929 = vadd.f32 %v837, %v913
        %v930 = vadd.f32 %v838, %v918
        %v931 = vadd.f32 %v839, %v923
        %v932 = vadd.f32 %v840, %v928
        %vm933 = vcmask 7168
        %934 = vst.msk [vmem:[#allocation3] sm:$0xff] %vm933, %v929
        %935 = vst.msk [vmem:[#allocation3 + $0x8] sm:$0xff] %vm933, %v930
        %936 = vst.msk [vmem:[#allocation3 + $0x10] sm:$0xff] %vm933, %v931
        %937 = vst.msk [vmem:[#allocation3 + $0x18] sm:$0xff] %vm933, %v932
        %938 = vst.msk [vmem:[#allocation2] sm:$0xff] %vm933, %v817
        %939 = vst.msk [vmem:[#allocation2 + $0x8] sm:$0xff] %vm933, %v818
        %940 = vst.msk [vmem:[#allocation2 + $0x10] sm:$0xff] %vm933, %v819
        %941 = vst.msk [vmem:[#allocation2 + $0x18] sm:$0xff] %vm933, %v820
        %v942 = vlaneseq
        %v943 = vand.u32 %v942, 127
        %v944 = vadd.s32 %v943, 128
        %v945 = vadd.s32 %v943, 256
        %v946 = vadd.s32 %v943, 384
        %s947 = smul.u32 %s32, 512
        %v948 = vstv %s947
        %v949 = vadd.s32 %v943, %v948
        %v950 = vadd.s32 %v944, %v948
        %v951 = vadd.s32 %v945, %v948
        %v952 = vadd.s32 %v946, %v948
        %v953 = vld [vmem:[#allocation4] sm:$0xff]
        %v954 = vld [vmem:[#allocation4 + $0x8] sm:$0xff]
        %v955 = vld [vmem:[#allocation4 + $0x10] sm:$0xff]
        %v956 = vld [vmem:[#allocation4 + $0x18] sm:$0xff]
        %957 = vset.pattern.permute.xlu0 0
        %958 = vperm.xlu0 %957, %v789
        %v959 = vpop.permute.xlu0 %958
        %960 = vset.pattern.permute.xlu0 0
        %961 = vperm.xlu0 %960, %v790
        %v962 = vpop.permute.xlu0 %961
        %963 = vset.pattern.permute.xlu0 0
        %964 = vperm.xlu0 %963, %v791
        %v965 = vpop.permute.xlu0 %964
        %966 = vset.pattern.permute.xlu0 0
        %967 = vperm.xlu0 %966, %v792
        %v968 = vpop.permute.xlu0 %967
        %vm969 = vcmp.eq.s32.totalorder %v949, %v959
        %vm970 = vcmp.eq.s32.totalorder %v950, %v959
        %vm971 = vcmp.eq.s32.totalorder %v951, %v959
        %vm972 = vcmp.eq.s32.totalorder %v952, %v959
        %vm973 = vcmp.eq.s32.totalorder %v949, %v962
        %vm974 = vcmp.eq.s32.totalorder %v950, %v962
        %vm975 = vcmp.eq.s32.totalorder %v951, %v962
        %vm976 = vcmp.eq.s32.totalorder %v952, %v962
        %vm977 = vcmp.eq.s32.totalorder %v949, %v965
        %vm978 = vcmp.eq.s32.totalorder %v950, %v965
        %vm979 = vcmp.eq.s32.totalorder %v951, %v965
        %vm980 = vcmp.eq.s32.totalorder %v952, %v965
        %vm981 = vcmp.eq.s32.totalorder %v949, %v968
        %vm982 = vcmp.eq.s32.totalorder %v950, %v968
        %vm983 = vcmp.eq.s32.totalorder %v951, %v968
        %vm984 = vcmp.eq.s32.totalorder %v952, %v968
        %v985 = vsel %vm969, %v662, 0.0
        %v986 = vsel %vm970, %v664, 0.0
        %v987 = vsel %vm971, %v715, 0.0
        %v988 = vsel %vm972, %v717, 0.0
        %v989 = vsel %vm973, %v666, 0.0
        %v990 = vsel %vm974, %v668, 0.0
        %v991 = vsel %vm975, %v719, 0.0
        %v992 = vsel %vm976, %v721, 0.0
        %v993 = vsel %vm977, %v672, 0.0
        %v994 = vsel %vm978, %v674, 0.0
        %v995 = vsel %vm979, %v725, 0.0
        %v996 = vsel %vm980, %v727, 0.0
        %v997 = vsel %vm981, %v676, 0.0
        %v998 = vsel %vm982, %v678, 0.0
        %v999 = vsel %vm983, %v729, 0.0
        %v1000 = vsel %vm984, %v731, 0.0
        %v1001 = vadd.f32 %v985, %v986
        %v1002 = vadd.f32 %v1001, %v987
        %v1003 = vadd.f32 %v1002, %v988
        %1004 = vadd.xlane.f32.xlu0 %v1003
        %v1005 = vpop.xlane.xlu0 %1004
        %v1006 = vadd.f32 %v989, %v990
        %v1007 = vadd.f32 %v1006, %v991
        %v1008 = vadd.f32 %v1007, %v992
        %1009 = vadd.xlane.f32.xlu0 %v1008
        %v1010 = vpop.xlane.xlu0 %1009
        %v1011 = vadd.f32 %v993, %v994
        %v1012 = vadd.f32 %v1011, %v995
        %v1013 = vadd.f32 %v1012, %v996
        %1014 = vadd.xlane.f32.xlu0 %v1013
        %v1015 = vpop.xlane.xlu0 %1014
        %v1016 = vadd.f32 %v997, %v998
        %v1017 = vadd.f32 %v1016, %v999
        %v1018 = vadd.f32 %v1017, %v1000
        %1019 = vadd.xlane.f32.xlu0 %v1018
        %v1020 = vpop.xlane.xlu0 %1019
        %v1021 = vadd.f32 %v953, %v1005
        %v1022 = vadd.f32 %v954, %v1010
        %v1023 = vadd.f32 %v955, %v1015
        %v1024 = vadd.f32 %v956, %v1020
        %1025 = vst.msk [vmem:[#allocation4] sm:$0xff] %vm933, %v1021
        %1026 = vst.msk [vmem:[#allocation4 + $0x8] sm:$0xff] %vm933, %v1022
        %1027 = vst.msk [vmem:[#allocation4 + $0x10] sm:$0xff] %vm933, %v1023
        %1028 = vst.msk [vmem:[#allocation4 + $0x18] sm:$0xff] %vm933, %v1024
        %p1029 = scmp.eq.s32.totalorder %s32, 1
        // Predicated region
        $region57: #{forward.3} parent=35 // pred_check
          %p1030 = pneg %p1029
        $region58: #{forward.3} parent=35 // pred_check_branch
          %1032 = sbr.rel (%p1030) target = $region60
        $region59: #{forward.3} parent=35 // pred_region
          %vm1033 = vcmp.ne.s32.totalorder %v789, 4294967196
          %vm1034 = vcmp.ne.s32.totalorder %v790, 4294967196
          %vm1035 = vcmp.ne.s32.totalorder %v791, 4294967196
          %vm1036 = vcmp.ne.s32.totalorder %v792, 4294967196
          %v1037 = vsel %vm1033, 1, 0
          %v1038 = vsel %vm1034, 1, 0
          %v1039 = vsel %vm1035, 1, 0
          %v1040 = vsel %vm1036, 1, 0
          %v1041 = vcvt.s32.f32 %v1037
          %v1042 = vcvt.s32.f32 %v1038
          %v1043 = vcvt.s32.f32 %v1039
          %v1044 = vcvt.s32.f32 %v1040
          %v1045 = vld [vmem:[#allocation2] sm:$0xff]
          %v1046 = vld [vmem:[#allocation2 + $0x8] sm:$0xff]
          %v1047 = vld [vmem:[#allocation2 + $0x10] sm:$0xff]
          %v1048 = vld [vmem:[#allocation2 + $0x18] sm:$0xff]
          %v1049 = vld [vmem:[#allocation3] sm:$0xff]
          %v1050 = vld [vmem:[#allocation3 + $0x8] sm:$0xff]
          %v1051 = vld [vmem:[#allocation3 + $0x10] sm:$0xff]
          %v1052 = vld [vmem:[#allocation3 + $0x18] sm:$0xff]
          %v1053 = vlog2.pop %v1049
          %v1054 = vmul.f32 %v1053, 0.6931472
          %v1055 = vlog2.pop %v1050
          %v1056 = vmul.f32 %v1055, 0.6931472
          %v1057 = vlog2.pop %v1051
          %v1058 = vmul.f32 %v1057, 0.6931472
          %v1059 = vlog2.pop %v1052
          %v1060 = vmul.f32 %v1059, 0.6931472
          %v1061 = vadd.f32 %v1045, %v1054
          %v1062 = vadd.f32 %v1046, %v1056
          %v1063 = vadd.f32 %v1047, %v1058
          %v1064 = vadd.f32 %v1048, %v1060
          %v1065 = vld [vmem:[#allocation4] sm:$0xff]
          %v1066 = vld [vmem:[#allocation4 + $0x8] sm:$0xff]
          %v1067 = vld [vmem:[#allocation4 + $0x10] sm:$0xff]
          %v1068 = vld [vmem:[#allocation4 + $0x18] sm:$0xff]
          %v1069 = vsub.f32 %v1061, %v1065
          %v1070 = vsub.f32 %v1062, %v1066
          %v1071 = vsub.f32 %v1063, %v1067
          %v1072 = vsub.f32 %v1064, %v1068
          %v1073 = vmul.f32 %v1041, %v1069
          %v1074 = vmul.f32 %v1042, %v1070
          %v1075 = vmul.f32 %v1043, %v1071
          %v1076 = vmul.f32 %v1044, %v1072
          %1077 = vst.msk [vmem:[#allocation14] sm:$0xff] %vm933, %v1073
          %1078 = vst.msk [vmem:[#allocation14 + $0x8] sm:$0xff] %vm933, %v1074
          %1079 = vst.msk [vmem:[#allocation14 + $0x10] sm:$0xff] %vm933, %v1075
          %1080 = vst.msk [vmem:[#allocation14 + $0x18] sm:$0xff] %vm933, %v1076
          %1081 = vst.msk [vmem:[#allocation16] sm:$0xff] %vm933, %v1041
          %1082 = vst.msk [vmem:[#allocation16 + $0x8] sm:$0xff] %vm933, %v1042
          %1083 = vst.msk [vmem:[#allocation16 + $0x10] sm:$0xff] %vm933, %v1043
          %1084 = vst.msk [vmem:[#allocation16 + $0x18] sm:$0xff] %vm933, %v1044
        $region60: #{forward.3} parent=35 // pred_fallthru
          _
        %s1085 = sand.u32 %s153, 1
        %s1086 = scalar_lea.sflag [#allocation7], %s1085
        %s1087 = sand.u32 %s153, 1
        %s1088 = smul.addr %s1087, 64
        %s1089 = scalar_lea.vmem [#allocation13], %s1088
        // Predicated region
        $region61: #{forward.3} parent=35 // pred_check
          %p1090 = pneg %p163
        $region62: #{forward.3} parent=35 // pred_check_branch
          %1092 = sbr.rel (%p1090) target = $region64
        $region63: #{forward.3} parent=35 // pred_region
          %s1093 = smul.u32 4, %s31
          %s1094 = smul.u32 4, %s32
          %s1096 = ssub.s32 1024, 1024
          %1097 = vsyncadd %s1086, %s1096
          %s1098 = smul.addr %s1093, 8
          %s1099 = sadd.s32 %s1094, %s1098
          %s1100 = smul.addr %s1099, 64
          %s1101 = scalar_lea.hbm %s4, %s1100
          %s1102 = sshll.u32 %s1089, 4
          %s1103 = int_to_ptr.vmem [resolvable:$true] %s1102
          %1108 = dma.vmem_to_hbm [thread:$0]  %s1103, 1024, %s1101, %s1086, 256, 512, 16
        $region64: #{forward.3} parent=35 // pred_fallthru
          _
        // Predicated region
        $region65: #{forward.3} parent=35 // pred_check
          %p1109 = pneg %p189
        $region66: #{forward.3} parent=35 // pred_check_branch
          %1111 = sbr.rel (%p1109) target = $region68
        $region67: #{forward.3} parent=35 // pred_region
          %s1112 = smul.u32 4, %s31
          %s1114 = ssub.s32 512, 512
          %1115 = vsyncadd [#allocation15], %s1114
          %s1116 = smul.addr %s1112, 128
          %s1117 = scalar_lea.hbm %s5, %s1116
          %s1118 = sshll.u32 [#allocation14], 4
          %s1119 = int_to_ptr.vmem [resolvable:$true] %s1118
          %1124 = dma.vmem_to_hbm [thread:$0]  %s1119, 512, %s1117, [#allocation15], 128, 128, 8
        $region68: #{forward.3} parent=35 // pred_fallthru
          _
        // Predicated region
        $region69: #{forward.3} parent=35 // pred_check
          %p1125 = pneg %p215
        $region70: #{forward.3} parent=35 // pred_check_branch
          %1127 = sbr.rel (%p1125) target = $region72
        $region71: #{forward.3} parent=35 // pred_region
          %s1128 = smul.u32 4, %s31
          %s1130 = ssub.s32 512, 512
          %1131 = vsyncadd [#allocation15], %s1130
          %s1132 = smul.addr %s1128, 128
          %s1133 = scalar_lea.hbm %s6, %s1132
          %s1134 = sshll.u32 [#allocation16], 4
          %s1135 = int_to_ptr.vmem [resolvable:$true] %s1134
          %1140 = dma.vmem_to_hbm [thread:$0]  %s1135, 512, %s1133, [#allocation15], 128, 128, 8
        $region72: #{forward.3} parent=35 // pred_fallthru
          _
        // Predicated region
        $region73: #{forward.3} parent=35 // pred_check
          %p1141 = pneg %p189
        $region74: #{forward.3} parent=35 // pred_check_branch
          %1143 = sbr.rel (%p1141) target = $region76
        $region75: #{forward.3} parent=35 // pred_region
          %1144 = dma.done [#allocation15], 512
        $region76: #{forward.3} parent=35 // pred_fallthru
          _
        // Predicated region
        $region77: #{forward.3} parent=35 // pred_check
          %p1145 = pneg %p215
        $region78: #{forward.3} parent=35 // pred_check_branch
          %1147 = sbr.rel (%p1145) target = $region80
        $region79: #{forward.3} parent=35 // pred_region
          %1148 = dma.done [#allocation15], 512
        $region80: #{forward.3} parent=35 // pred_fallthru
          _
      $region36: #{forward.3} parent=5 // pred_fallthru
        _
      %p1149 = scmp.le.s32.totalorder 2, %s22
      // Predicated region
      $region81: #{forward.3} parent=5 // pred_check
        %p1150 = pneg %p1149
      $region82: #{forward.3} parent=5 // pred_check_branch
        %1152 = sbr.rel (%p1150) target = $region84
      $region83: #{forward.3} parent=5 // pred_region
        %s1153 = ssub.s32 %s22, 2
        // Predicated region
        $region85: #{forward.3} parent=83 // pred_check
          %p1154 = pneg %p169
        $region86: #{forward.3} parent=83 // pred_check_branch
          %1156 = sbr.rel (%p1154) target = $region88
        $region87: #{forward.3} parent=83 // pred_region
          %s1157 = sand.u32 %s154, 1
          %s1158 = scalar_lea.sflag [#allocation7], %s1157
          %s1159 = sand.u32 %s154, 1
          %s1160 = smul.addr %s1159, 64
          %s1161 = scalar_lea.vmem [#allocation13], %s1160
          %1162 = dma.done %s1158, 1024
        $region88: #{forward.3} parent=83 // pred_fallthru
          _
      $region84: #{forward.3} parent=5 // pred_fallthru
        _
    $region6: #{forward.3} parent=1 // loop_footer
      %s26 = sadd.s32 1, %s22
    $region7: #{forward.3} parent=1 // loop_footer_branch
      %21 = sbr.rel target = $region3
    $region8: #{forward.3} parent=1 // loop_exit
      _
    %1163 = vsyncpa [#allocation6], 1
    %s1164 = scalar_lea.sflag [#allocation6], 1
    %1165 = vsyncpa %s1164, 1
    %1166 = vsyncpa [#allocation9], 1
    %s1167 = scalar_lea.sflag [#allocation9], 1
    %1168 = vsyncpa %s1167, 1
    %1169 = vsyncpa [#allocation12], 1
    %1170 = vsyncpa [#allocation7], 1
    %s1171 = scalar_lea.sflag [#allocation7], 1
    %1172 = vsyncpa %s1171, 1
    %1173 = vsyncpa [#allocation15], 1

// kernel: forward.2
$region0: #{forward.2}
  #allocation0 [shape = 'u32[]', space=smem, size = 0x4, offset = 0x4, fixed_abs, tag = 'smem constant byte address 0x4 - core index']
  #allocation1 [shape = 'u32[144,128]{1,0:T(1,128)}', space=vmem, size = 0x12000, scoped, tag = 'internal scratch']
  %s0 = inlined_call_operand.hbm [shape: f32[8,768], index: 0, kind: input, shape index: {}]
  %s1 = inlined_call_operand.hbm [shape: bf16[768,128], index: 1, kind: input, shape index: {}]
  %s2 = inlined_call_operand.hbm [shape: f32[1,128], index: 2, kind: input, shape index: {}]
  %s3 = inlined_call_operand.hbm [shape: bf16[128,320], index: 3, kind: input, shape index: {}]
  %s4 = inlined_call_operand.hbm [shape: f32[1,320], index: 4, kind: input, shape index: {}]
  %s5 = inlined_call_operand.hbm [shape: bf16[320,640], index: 5, kind: input, shape index: {}]
  %s6 = inlined_call_operand.hbm [shape: f32[1,640], index: 6, kind: input, shape index: {}]
  %s7 = inlined_call_operand.hbm [shape: bf16[8,640], index: 7, kind: output, shape index: {}]
  %s8 = sld [smem:[#allocation0]]
  $region66: #{forward.2} parent=0
    _
  %s10 = ssub.s32 1, %s8
  %s11 = scalar_select 0, %s10, %s8
  $region1: #{forward.2} parent=0
    #allocation2 [shape = 'u8[24576]{0}', space=vmem, size = 0x6000, scoped, tag = 'input window, operand 0, single buffered']
    #allocation3 [shape = 's32[1]{0}', space=sflag, size = 0x4, scoped, tag = 'scoped memory for forward.2']
    #allocation4 [shape = 's32[1]{0}', space=sflag, size = 0x4, scoped, tag = 'scoped memory for forward.2']
    #allocation5 [shape = 'u8[196608]{0}', space=vmem, size = 0x30000, scoped, tag = 'input window, operand 1, single buffered']
    #allocation6 [shape = 's32[1]{0}', space=sflag, size = 0x4, scoped, tag = 'scoped memory for forward.2']
    #allocation7 [shape = 'u8[512]{0}', space=vmem, size = 0x400, scoped, tag = 'input window, operand 2, single buffered']
    #allocation8 [shape = 'u8[98304]{0}', space=vmem, size = 0x18000, scoped, tag = 'input window, operand 3, single buffered']
    #allocation9 [shape = 's32[1]{0}', space=sflag, size = 0x4, scoped, tag = 'scoped memory for forward.2']
    #allocation10 [shape = 'u8[1536]{0}', space=vmem, size = 0x800, scoped, tag = 'input window, operand 4, single buffered']
    #allocation11 [shape = 'u8[409600]{0}', space=vmem, size = 0x64000, scoped, tag = 'input window, operand 5, single buffered']
    #allocation12 [shape = 's32[1]{0}', space=sflag, size = 0x4, scoped, tag = 'scoped memory for forward.2']
    #allocation13 [shape = 'u8[2560]{0}', space=vmem, size = 0xc00, scoped, tag = 'input window, operand 6, single buffered']
    #allocation14 [shape = 'u8[10240]{0}', space=vmem, size = 0x2800, scoped, tag = 'output window, operand 0, single buffered']
    %12 = vsyncpa [#allocation3], 0
    %13 = vsyncpa [#allocation6], 0
    %14 = vsyncpa [#allocation9], 0
    %15 = vsyncpa [#allocation12], 0
    %16 = vsyncpa [#allocation4], 0
    // Predicated region
    $region2: #{forward.2} parent=1 // pred_check
      _
    $region3: #{forward.2} parent=1 // pred_check_branch
      %18 = sbr.rel (0) target = $region5
    $region4: #{forward.2} parent=1 // pred_region
      %s20 = ssub.s32 768, 768
      %21 = vsyncadd [#allocation3], %s20
      %s23 = sshll.u32 [#allocation2], 4
      %s24 = int_to_ptr.vmem [resolvable:$true] %s23
      %26 = dma.hbm_to_vmem [thread:$0]  %s0, 768, %s24, [#allocation3]
    $region5: #{forward.2} parent=1 // pred_fallthru
      _
    // Predicated region
    $region6: #{forward.2} parent=1 // pred_check
      _
    $region7: #{forward.2} parent=1 // pred_check_branch
      %28 = sbr.rel (0) target = $region9
    $region8: #{forward.2} parent=1 // pred_region
      %s30 = ssub.s32 6144, 6144
      %31 = vsyncadd [#allocation6], %s30
      %s32 = sshll.u32 [#allocation5], 4
      %s33 = int_to_ptr.vmem [resolvable:$true] %s32
      %38 = dma.hbm_to_vmem [thread:$0]  %s1, 6144, %s33, [#allocation6], 64, 64, 4
    $region9: #{forward.2} parent=1 // pred_fallthru
      _
    // Predicated region
    $region10: #{forward.2} parent=1 // pred_check
      _
    $region11: #{forward.2} parent=1 // pred_check_branch
      %40 = sbr.rel (0) target = $region13
    $region12: #{forward.2} parent=1 // pred_region
      %s42 = ssub.s32 16, 16
      %43 = vsyncadd [#allocation6], %s42
      %s45 = sshll.u32 [#allocation7], 4
      %s46 = int_to_ptr.vmem [resolvable:$true] %s45
      %48 = dma.hbm_to_vmem [thread:$0]  %s2, 16, %s46, [#allocation6]
    $region13: #{forward.2} parent=1 // pred_fallthru
      _
    // Predicated region
    $region14: #{forward.2} parent=1 // pred_check
      _
    $region15: #{forward.2} parent=1 // pred_check_branch
      %50 = sbr.rel (0) target = $region17
    $region16: #{forward.2} parent=1 // pred_region
      %s52 = ssub.s32 3072, 3072
      %53 = vsyncadd [#allocation9], %s52
      %s54 = sshll.u32 [#allocation8], 4
      %s55 = int_to_ptr.vmem [resolvable:$true] %s54
      %60 = dma.hbm_to_vmem [thread:$0]  %s3, 3072, %s55, [#allocation9], 192, 192, 12
    $region17: #{forward.2} parent=1 // pred_fallthru
      _
    // Predicated region
    $region18: #{forward.2} parent=1 // pred_check
      _
    $region19: #{forward.2} parent=1 // pred_check_branch
      %62 = sbr.rel (0) target = $region21
    $region20: #{forward.2} parent=1 // pred_region
      %s64 = ssub.s32 48, 48
      %65 = vsyncadd [#allocation9], %s64
      %s67 = sshll.u32 [#allocation10], 4
      %s68 = int_to_ptr.vmem [resolvable:$true] %s67
      %70 = dma.hbm_to_vmem [thread:$0]  %s4, 48, %s68, [#allocation9]
    $region21: #{forward.2} parent=1 // pred_fallthru
      _
    // Predicated region
    $region22: #{forward.2} parent=1 // pred_check
      _
    $region23: #{forward.2} parent=1 // pred_check_branch
      %72 = sbr.rel (0) target = $region25
    $region24: #{forward.2} parent=1 // pred_region
      %s74 = ssub.s32 12800, 12800
      %75 = vsyncadd [#allocation12], %s74
      %s76 = sshll.u32 [#allocation11], 4
      %s77 = int_to_ptr.vmem [resolvable:$true] %s76
      %82 = dma.hbm_to_vmem [thread:$0]  %s5, 12800, %s77, [#allocation12], 320, 320, 20
    $region25: #{forward.2} parent=1 // pred_fallthru
      _
    // Predicated region
    $region26: #{forward.2} parent=1 // pred_check
      _
    $region27: #{forward.2} parent=1 // pred_check_branch
      %84 = sbr.rel (0) target = $region29
    $region28: #{forward.2} parent=1 // pred_region
      %s86 = ssub.s32 80, 80
      %87 = vsyncadd [#allocation12], %s86
      %s89 = sshll.u32 [#allocation13], 4
      %s90 = int_to_ptr.vmem [resolvable:$true] %s89
      %92 = dma.hbm_to_vmem [thread:$0]  %s6, 80, %s90, [#allocation12]
    $region29: #{forward.2} parent=1 // pred_fallthru
      _
    // Predicated region
    $region30: #{forward.2} parent=1 // pred_check
      _
    $region31: #{forward.2} parent=1 // pred_check_branch
      %94 = sbr.rel (0) target = $region33
    $region32: #{forward.2} parent=1 // pred_region
      %95 = dma.done [#allocation3], 768
    $region33: #{forward.2} parent=1 // pred_fallthru
      _
    // Predicated region
    $region34: #{forward.2} parent=1 // pred_check
      _
    $region35: #{forward.2} parent=1 // pred_check_branch
      %97 = sbr.rel (0) target = $region37
    $region36: #{forward.2} parent=1 // pred_region
      %98 = dma.done [#allocation6], 6144
    $region37: #{forward.2} parent=1 // pred_fallthru
      _
    // Predicated region
    $region38: #{forward.2} parent=1 // pred_check
      _
    $region39: #{forward.2} parent=1 // pred_check_branch
      %100 = sbr.rel (0) target = $region41
    $region40: #{forward.2} parent=1 // pred_region
      %101 = dma.done [#allocation6], 16
    $region41: #{forward.2} parent=1 // pred_fallthru
      _
    // Predicated region
    $region42: #{forward.2} parent=1 // pred_check
      _
    $region43: #{forward.2} parent=1 // pred_check_branch
      %103 = sbr.rel (0) target = $region45
    $region44: #{forward.2} parent=1 // pred_region
      %104 = dma.done [#allocation9], 3072
    $region45: #{forward.2} parent=1 // pred_fallthru
      _
    // Predicated region
    $region46: #{forward.2} parent=1 // pred_check
      _
    $region47: #{forward.2} parent=1 // pred_check_branch
      %106 = sbr.rel (0) target = $region49
    $region48: #{forward.2} parent=1 // pred_region
      %107 = dma.done [#allocation9], 48
    $region49: #{forward.2} parent=1 // pred_fallthru
      _
    // Predicated region
    $region50: #{forward.2} parent=1 // pred_check
      _
    $region51: #{forward.2} parent=1 // pred_check_branch
      %109 = sbr.rel (0) target = $region53
    $region52: #{forward.2} parent=1 // pred_region
      %110 = dma.done [#allocation12], 12800
    $region53: #{forward.2} parent=1 // pred_fallthru
      _
    // Predicated region
    $region54: #{forward.2} parent=1 // pred_check
      _
    $region55: #{forward.2} parent=1 // pred_check_branch
      %112 = sbr.rel (0) target = $region57
    $region56: #{forward.2} parent=1 // pred_region
      %113 = dma.done [#allocation12], 80
    $region57: #{forward.2} parent=1 // pred_fallthru
      _
    %v115 = vld [vmem:[#allocation2] sm:$0xff]
    %v116 = vld [vmem:[#allocation2 + $0x8] sm:$0xff]
    %v117 = vld [vmem:[#allocation2 + $0x10] sm:$0xff]
    %v118 = vld [vmem:[#allocation2 + $0x18] sm:$0xff]
    %v119 = vld [vmem:[#allocation2 + $0x20] sm:$0xff]
    %v120 = vld [vmem:[#allocation2 + $0x28] sm:$0xff]
    %v121 = vpack.c.bf16 %v115, %v115
    %v122 = vpack.c.bf16 %v116, %v116
    %v123 = vpack.c.bf16 %v117, %v117
    %v124 = vpack.c.bf16 %v118, %v118
    %v125 = vpack.c.bf16 %v119, %v119
    %v126 = vpack.c.bf16 %v120, %v120
    %v127 = vld [vmem:[#allocation5] sm:$0xf]
    %v128 = vld [vmem:[#allocation5 + $0x4] sm:$0xf]
    %v129 = vld [vmem:[#allocation5 + $0x8] sm:$0xf]
    %v130 = vld [vmem:[#allocation5 + $0xc] sm:$0xf]
    %v131 = vld [vmem:[#allocation5 + $0x10] sm:$0xf]
    %v132 = vld [vmem:[#allocation5 + $0x14] sm:$0xf]
    %v133 = vld [vmem:[#allocation5 + $0x18] sm:$0xf]
    %v134 = vld [vmem:[#allocation5 + $0x1c] sm:$0xf]
    %v135 = vld [vmem:[#allocation5 + $0x20] sm:$0xf]
    %v136 = vld [vmem:[#allocation5 + $0x24] sm:$0xf]
    %v137 = vld [vmem:[#allocation5 + $0x28] sm:$0xf]
    %v138 = vld [vmem:[#allocation5 + $0x2c] sm:$0xf]
    %v139 = vld [vmem:[#allocation5 + $0x30] sm:$0xf]
    %v140 = vld [vmem:[#allocation5 + $0x34] sm:$0xf]
    %v141 = vld [vmem:[#allocation5 + $0x38] sm:$0xf]
    %v142 = vld [vmem:[#allocation5 + $0x3c] sm:$0xf]
    %v143 = vld [vmem:[#allocation5 + $0x40] sm:$0xf]
    %v144 = vld [vmem:[#allocation5 + $0x44] sm:$0xf]
    %v145 = vld [vmem:[#allocation5 + $0x48] sm:$0xf]
    %v146 = vld [vmem:[#allocation5 + $0x4c] sm:$0xf]
    %v147 = vld [vmem:[#allocation5 + $0x50] sm:$0xf]
    %v148 = vld [vmem:[#allocation5 + $0x54] sm:$0xf]
    %v149 = vld [vmem:[#allocation5 + $0x58] sm:$0xf]
    %v150 = vld [vmem:[#allocation5 + $0x5c] sm:$0xf]
    %v151 = vld [vmem:[#allocation5 + $0x60] sm:$0xf]
    %v152 = vld [vmem:[#allocation5 + $0x64] sm:$0xf]
    %v153 = vld [vmem:[#allocation5 + $0x68] sm:$0xf]
    %v154 = vld [vmem:[#allocation5 + $0x6c] sm:$0xf]
    %v155 = vld [vmem:[#allocation5 + $0x70] sm:$0xf]
    %v156 = vld [vmem:[#allocation5 + $0x74] sm:$0xf]
    %v157 = vld [vmem:[#allocation5 + $0x78] sm:$0xf]
    %v158 = vld [vmem:[#allocation5 + $0x7c] sm:$0xf]
    %v159 = vld [vmem:[#allocation5 + $0x80] sm:$0xf]
    %v160 = vld [vmem:[#allocation5 + $0x84] sm:$0xf]
    %v161 = vld [vmem:[#allocation5 + $0x88] sm:$0xf]
    %v162 = vld [vmem:[#allocation5 + $0x8c] sm:$0xf]
    %v163 = vld [vmem:[#allocation5 + $0x90] sm:$0xf]
    %v164 = vld [vmem:[#allocation5 + $0x94] sm:$0xf]
    %v165 = vld [vmem:[#allocation5 + $0x98] sm:$0xf]
    %v166 = vld [vmem:[#allocation5 + $0x9c] sm:$0xf]
    %v167 = vld [vmem:[#allocation5 + $0xa0] sm:$0xf]
    %v168 = vld [vmem:[#allocation5 + $0xa4] sm:$0xf]
    %v169 = vld [vmem:[#allocation5 + $0xa8] sm:$0xf]
    %v170 = vld [vmem:[#allocation5 + $0xac] sm:$0xf]
    %v171 = vld [vmem:[#allocation5 + $0xb0] sm:$0xf]
    %v172 = vld [vmem:[#allocation5 + $0xb4] sm:$0xf]
    %v173 = vld [vmem:[#allocation5 + $0xb8] sm:$0xf]
    %v174 = vld [vmem:[#allocation5 + $0xbc] sm:$0xf]
    %v175 = vld [vmem:[#allocation5 + $0xc0] sm:$0xf]
    %v176 = vld [vmem:[#allocation5 + $0xc4] sm:$0xf]
    %v177 = vld [vmem:[#allocation5 + $0xc8] sm:$0xf]
    %v178 = vld [vmem:[#allocation5 + $0xcc] sm:$0xf]
    %v179 = vld [vmem:[#allocation5 + $0xd0] sm:$0xf]
    %v180 = vld [vmem:[#allocation5 + $0xd4] sm:$0xf]
    %v181 = vld [vmem:[#allocation5 + $0xd8] sm:$0xf]
    %v182 = vld [vmem:[#allocation5 + $0xdc] sm:$0xf]
    %v183 = vld [vmem:[#allocation5 + $0xe0] sm:$0xf]
    %v184 = vld [vmem:[#allocation5 + $0xe4] sm:$0xf]
    %v185 = vld [vmem:[#allocation5 + $0xe8] sm:$0xf]
    %v186 = vld [vmem:[#allocation5 + $0xec] sm:$0xf]
    %v187 = vld [vmem:[#allocation5 + $0xf0] sm:$0xf]
    %v188 = vld [vmem:[#allocation5 + $0xf4] sm:$0xf]
    %v189 = vld [vmem:[#allocation5 + $0xf8] sm:$0xf]
    %v190 = vld [vmem:[#allocation5 + $0xfc] sm:$0xf]
    %v191 = vld [vmem:[#allocation5 + $0x100] sm:$0xf]
    %v192 = vld [vmem:[#allocation5 + $0x104] sm:$0xf]
    %v193 = vld [vmem:[#allocation5 + $0x108] sm:$0xf]
    %v194 = vld [vmem:[#allocation5 + $0x10c] sm:$0xf]
    %v195 = vld [vmem:[#allocation5 + $0x110] sm:$0xf]
    %v196 = vld [vmem:[#allocation5 + $0x114] sm:$0xf]
    %v197 = vld [vmem:[#allocation5 + $0x118] sm:$0xf]
    %v198 = vld [vmem:[#allocation5 + $0x11c] sm:$0xf]
    %v199 = vld [vmem:[#allocation5 + $0x120] sm:$0xf]
    %v200 = vld [vmem:[#allocation5 + $0x124] sm:$0xf]
    %v201 = vld [vmem:[#allocation5 + $0x128] sm:$0xf]
    %v202 = vld [vmem:[#allocation5 + $0x12c] sm:$0xf]
    %v203 = vld [vmem:[#allocation5 + $0x130] sm:$0xf]
    %v204 = vld [vmem:[#allocation5 + $0x134] sm:$0xf]
    %v205 = vld [vmem:[#allocation5 + $0x138] sm:$0xf]
    %v206 = vld [vmem:[#allocation5 + $0x13c] sm:$0xf]
    %v207 = vld [vmem:[#allocation5 + $0x140] sm:$0xf]
    %v208 = vld [vmem:[#allocation5 + $0x144] sm:$0xf]
    %v209 = vld [vmem:[#allocation5 + $0x148] sm:$0xf]
    %v210 = vld [vmem:[#allocation5 + $0x14c] sm:$0xf]
    %v211 = vld [vmem:[#allocation5 + $0x150] sm:$0xf]
    %v212 = vld [vmem:[#allocation5 + $0x154] sm:$0xf]
    %v213 = vld [vmem:[#allocation5 + $0x158] sm:$0xf]
    %v214 = vld [vmem:[#allocation5 + $0x15c] sm:$0xf]
    %v215 = vld [vmem:[#allocation5 + $0x160] sm:$0xf]
    %v216 = vld [vmem:[#allocation5 + $0x164] sm:$0xf]
    %v217 = vld [vmem:[#allocation5 + $0x168] sm:$0xf]
    %v218 = vld [vmem:[#allocation5 + $0x16c] sm:$0xf]
    %v219 = vld [vmem:[#allocation5 + $0x170] sm:$0xf]
    %v220 = vld [vmem:[#allocation5 + $0x174] sm:$0xf]
    %v221 = vld [vmem:[#allocation5 + $0x178] sm:$0xf]
    %v222 = vld [vmem:[#allocation5 + $0x17c] sm:$0xf]
    %v223 = vld [vmem:[#allocation7] sm:$0x1]
    %v225 = vlaneseq
    %v226 = vshrl.u32 %v225, 7
    %v227 = vsub.s32 0, %v226
    %v228 = vrot.slane %v223, %v227
    %v326 = vunpack.c.l.b16 %v127
    %v327 = vunpack.c.l.b16 %v128
    %v328 = vunpack.c.l.b16 %v129
    %v329 = vunpack.c.l.b16 %v130
    %v330 = vunpack.c.l.b16 %v131
    %v331 = vunpack.c.l.b16 %v132
    %v332 = vunpack.c.l.b16 %v133
    %v333 = vunpack.c.l.b16 %v134
    %v334 = vunpack.c.l.b16 %v135
    %v335 = vunpack.c.l.b16 %v136
    %v336 = vunpack.c.l.b16 %v137
    %v337 = vunpack.c.l.b16 %v138
    %v338 = vunpack.c.l.b16 %v139
    %v339 = vunpack.c.l.b16 %v140
    %v340 = vunpack.c.l.b16 %v141
    %v341 = vunpack.c.l.b16 %v142
    %v342 = vunpack.c.l.b16 %v143
    %v343 = vunpack.c.l.b16 %v144
    %v344 = vunpack.c.l.b16 %v145
    %v345 = vunpack.c.l.b16 %v146
    %v346 = vunpack.c.l.b16 %v147
    %v347 = vunpack.c.l.b16 %v148
    %v348 = vunpack.c.l.b16 %v149
    %v349 = vunpack.c.l.b16 %v150
    %v350 = vunpack.c.l.b16 %v151
    %v351 = vunpack.c.l.b16 %v152
    %v352 = vunpack.c.l.b16 %v153
    %v353 = vunpack.c.l.b16 %v154
    %v354 = vunpack.c.l.b16 %v155
    %v355 = vunpack.c.l.b16 %v156
    %v356 = vunpack.c.l.b16 %v157
    %v357 = vunpack.c.l.b16 %v158
    %v358 = vunpack.c.l.b16 %v159
    %v359 = vunpack.c.l.b16 %v160
    %v360 = vunpack.c.l.b16 %v161
    %v361 = vunpack.c.l.b16 %v162
    %v362 = vunpack.c.l.b16 %v163
    %v363 = vunpack.c.l.b16 %v164
    %v364 = vunpack.c.l.b16 %v165
    %v365 = vunpack.c.l.b16 %v166
    %v366 = vunpack.c.l.b16 %v167
    %v367 = vunpack.c.l.b16 %v168
    %v368 = vunpack.c.l.b16 %v169
    %v369 = vunpack.c.l.b16 %v170
    %v370 = vunpack.c.l.b16 %v171
    %v371 = vunpack.c.l.b16 %v172
    %v372 = vunpack.c.l.b16 %v173
    %v373 = vunpack.c.l.b16 %v174
    %v374 = vunpack.c.l.b16 %v175
    %v375 = vunpack.c.l.b16 %v176
    %v376 = vunpack.c.l.b16 %v177
    %v377 = vunpack.c.l.b16 %v178
    %v378 = vunpack.c.l.b16 %v179
    %v379 = vunpack.c.l.b16 %v180
    %v380 = vunpack.c.l.b16 %v181
    %v381 = vunpack.c.l.b16 %v182
    %v382 = vunpack.c.l.b16 %v183
    %v383 = vunpack.c.l.b16 %v184
    %v384 = vunpack.c.l.b16 %v185
    %v385 = vunpack.c.l.b16 %v186
    %v386 = vunpack.c.l.b16 %v187
    %v387 = vunpack.c.l.b16 %v188
    %v388 = vunpack.c.l.b16 %v189
    %v389 = vunpack.c.l.b16 %v190
    %v390 = vunpack.c.l.b16 %v191
    %v391 = vunpack.c.l.b16 %v192
    %v392 = vunpack.c.l.b16 %v193
    %v393 = vunpack.c.l.b16 %v194
    %v394 = vunpack.c.l.b16 %v195
    %v395 = vunpack.c.l.b16 %v196
    %v396 = vunpack.c.l.b16 %v197
    %v397 = vunpack.c.l.b16 %v198
    %v398 = vunpack.c.l.b16 %v199
    %v399 = vunpack.c.l.b16 %v200
    %v400 = vunpack.c.l.b16 %v201
    %v401 = vunpack.c.l.b16 %v202
    %v402 = vunpack.c.l.b16 %v203
    %v403 = vunpack.c.l.b16 %v204
    %v404 = vunpack.c.l.b16 %v205
    %v405 = vunpack.c.l.b16 %v206
    %v406 = vunpack.c.l.b16 %v207
    %v407 = vunpack.c.l.b16 %v208
    %v408 = vunpack.c.l.b16 %v209
    %v409 = vunpack.c.l.b16 %v210
    %v410 = vunpack.c.l.b16 %v211
    %v411 = vunpack.c.l.b16 %v212
    %v412 = vunpack.c.l.b16 %v213
    %v413 = vunpack.c.l.b16 %v214
    %v414 = vunpack.c.l.b16 %v215
    %v415 = vunpack.c.l.b16 %v216
    %v416 = vunpack.c.l.b16 %v217
    %v417 = vunpack.c.l.b16 %v218
    %v418 = vunpack.c.l.b16 %v219
    %v419 = vunpack.c.l.b16 %v220
    %v420 = vunpack.c.l.b16 %v221
    %v421 = vunpack.c.l.b16 %v222
    %v422 = vpack.c.b16 %v327, %v326
    %v423 = vpack.c.b16 %v329, %v328
    %v424 = vpack.c.b16 %v331, %v330
    %v425 = vpack.c.b16 %v333, %v332
    %v426 = vpack.c.b16 %v335, %v334
    %v427 = vpack.c.b16 %v337, %v336
    %v428 = vpack.c.b16 %v339, %v338
    %v429 = vpack.c.b16 %v341, %v340
    %v430 = vpack.c.b16 %v343, %v342
    %v431 = vpack.c.b16 %v345, %v344
    %v432 = vpack.c.b16 %v347, %v346
    %v433 = vpack.c.b16 %v349, %v348
    %v434 = vpack.c.b16 %v351, %v350
    %v435 = vpack.c.b16 %v353, %v352
    %v436 = vpack.c.b16 %v355, %v354
    %v437 = vpack.c.b16 %v357, %v356
    %v438 = vpack.c.b16 %v359, %v358
    %v439 = vpack.c.b16 %v361, %v360
    %v440 = vpack.c.b16 %v363, %v362
    %v441 = vpack.c.b16 %v365, %v364
    %v442 = vpack.c.b16 %v367, %v366
    %v443 = vpack.c.b16 %v369, %v368
    %v444 = vpack.c.b16 %v371, %v370
    %v445 = vpack.c.b16 %v373, %v372
    %v446 = vpack.c.b16 %v375, %v374
    %v447 = vpack.c.b16 %v377, %v376
    %v448 = vpack.c.b16 %v379, %v378
    %v449 = vpack.c.b16 %v381, %v380
    %v450 = vpack.c.b16 %v383, %v382
    %v451 = vpack.c.b16 %v385, %v384
    %v452 = vpack.c.b16 %v387, %v386
    %v453 = vpack.c.b16 %v389, %v388
    %v454 = vpack.c.b16 %v391, %v390
    %v455 = vpack.c.b16 %v393, %v392
    %v456 = vpack.c.b16 %v395, %v394
    %v457 = vpack.c.b16 %v397, %v396
    %v458 = vpack.c.b16 %v399, %v398
    %v459 = vpack.c.b16 %v401, %v400
    %v460 = vpack.c.b16 %v403, %v402
    %v461 = vpack.c.b16 %v405, %v404
    %v462 = vpack.c.b16 %v407, %v406
    %v463 = vpack.c.b16 %v409, %v408
    %v464 = vpack.c.b16 %v411, %v410
    %v465 = vpack.c.b16 %v413, %v412
    %v466 = vpack.c.b16 %v415, %v414
    %v467 = vpack.c.b16 %v417, %v416
    %v468 = vpack.c.b16 %v419, %v418
    %v469 = vpack.c.b16 %v421, %v420
    %518 = vmatprep.subr.bf16.mxu0 0
    %519 = vmatpush1.bf16.msra.mxu0 %v422
    %520 = vmatprep.subr.bf16.mxu0 0
    %521 = vmatpush1.bf16.msra.mxu0 %v423
    %522 = vmatprep.subr.bf16.mxu0 0
    %523 = vmatpush1.bf16.msra.mxu0 %v424
    %524 = vmatprep.subr.bf16.mxu0 0
    %525 = vmatpush1.bf16.msra.mxu0 %v425
    %526 = vmatprep.subr.bf16.mxu0 0
    %527 = vmatpush1.bf16.msra.mxu0 %v426
    %528 = vmatprep.subr.bf16.mxu0 0
    %529 = vmatpush1.bf16.msra.mxu0 %v427
    %530 = vmatprep.subr.bf16.mxu0 0
    %531 = vmatpush1.bf16.msra.mxu0 %v428
    %532 = vmatprep.subr.bf16.mxu0 0
    %533 = vmatpush1.bf16.msra.mxu0 %v429
    %534 = vmatprep.subr.bf16.mxu0 0
    %535 = vmatpush1.bf16.msra.mxu0 %v430
    %536 = vmatprep.subr.bf16.mxu0 0
    %537 = vmatpush1.bf16.msra.mxu0 %v431
    %538 = vmatprep.subr.bf16.mxu0 0
    %539 = vmatpush1.bf16.msra.mxu0 %v432
    %540 = vmatprep.subr.bf16.mxu0 0
    %541 = vmatpush1.bf16.msra.mxu0 %v433
    %542 = vmatprep.subr.bf16.mxu0 0
    %543 = vmatpush1.bf16.msra.mxu0 %v434
    %544 = vmatprep.subr.bf16.mxu0 0
    %545 = vmatpush1.bf16.msra.mxu0 %v435
    %546 = vmatprep.subr.bf16.mxu0 0
    %547 = vmatpush1.bf16.msra.mxu0 %v436
    %548 = vmatprep.subr.bf16.mxu0 0
    %549 = vmatpush1.bf16.msra.mxu0 %v437
    %550 = vmatprep.mubr.bf16.mxu0 %v122
    %551 = vmatmul.mubr.bf16.gmra.mrb[0].mxu0 %v121
    %v552 = vpop.f32.mrb[0].mxu0
    %v553 = vadd.f32 %v228, %v552
    %v554 = vpop.f32.mrb[0].mxu0
    %v555 = vpop.f32.mrb[0].mxu0
    %v556 = vpop.f32.mrb[0].mxu0
    %557 = vdwg.mxu0
    %558 = vmatprep.subr.bf16.mxu0 0
    %559 = vmatpush1.bf16.msra.mxu0 %v438
    %560 = vmatprep.subr.bf16.mxu0 0
    %561 = vmatpush1.bf16.msra.mxu0 %v439
    %562 = vmatprep.subr.bf16.mxu0 0
    %563 = vmatpush1.bf16.msra.mxu0 %v440
    %564 = vmatprep.subr.bf16.mxu0 0
    %565 = vmatpush1.bf16.msra.mxu0 %v441
    %566 = vmatprep.subr.bf16.mxu0 0
    %567 = vmatpush1.bf16.msra.mxu0 %v442
    %568 = vmatprep.subr.bf16.mxu0 0
    %569 = vmatpush1.bf16.msra.mxu0 %v443
    %570 = vmatprep.subr.bf16.mxu0 0
    %571 = vmatpush1.bf16.msra.mxu0 %v444
    %572 = vmatprep.subr.bf16.mxu0 0
    %573 = vmatpush1.bf16.msra.mxu0 %v445
    %574 = vmatprep.subr.bf16.mxu0 0
    %575 = vmatpush1.bf16.msra.mxu0 %v446
    %576 = vmatprep.subr.bf16.mxu0 0
    %577 = vmatpush1.bf16.msra.mxu0 %v447
    %578 = vmatprep.subr.bf16.mxu0 0
    %579 = vmatpush1.bf16.msra.mxu0 %v448
    %580 = vmatprep.subr.bf16.mxu0 0
    %581 = vmatpush1.bf16.msra.mxu0 %v449
    %582 = vmatprep.subr.bf16.mxu0 0
    %583 = vmatpush1.bf16.msra.mxu0 %v450
    %584 = vmatprep.subr.bf16.mxu0 0
    %585 = vmatpush1.bf16.msra.mxu0 %v451
    %586 = vmatprep.subr.bf16.mxu0 0
    %587 = vmatpush1.bf16.msra.mxu0 %v452
    %588 = vmatprep.subr.bf16.mxu0 0
    %589 = vmatpush1.bf16.msra.mxu0 %v453
    %590 = vmatprep.mubr.bf16.mxu0 %v124
    %591 = vmatmul.mubr.bf16.gmra.mrb[0].mxu0 %v123
    %v592 = vpop.f32.mrb[0].mxu0
    %v593 = vadd.f32 %v553, %v592
    %v594 = vpop.f32.mrb[0].mxu0
    %v595 = vpop.f32.mrb[0].mxu0
    %v596 = vpop.f32.mrb[0].mxu0
    %597 = vdwg.mxu0
    %598 = vmatprep.subr.bf16.mxu0 0
    %599 = vmatpush1.bf16.msra.mxu0 %v454
    %600 = vmatprep.subr.bf16.mxu0 0
    %601 = vmatpush1.bf16.msra.mxu0 %v455
    %602 = vmatprep.subr.bf16.mxu0 0
    %603 = vmatpush1.bf16.msra.mxu0 %v456
    %604 = vmatprep.subr.bf16.mxu0 0
    %605 = vmatpush1.bf16.msra.mxu0 %v457
    %606 = vmatprep.subr.bf16.mxu0 0
    %607 = vmatpush1.bf16.msra.mxu0 %v458
    %608 = vmatprep.subr.bf16.mxu0 0
    %609 = vmatpush1.bf16.msra.mxu0 %v459
    %610 = vmatprep.subr.bf16.mxu0 0
    %611 = vmatpush1.bf16.msra.mxu0 %v460
    %612 = vmatprep.subr.bf16.mxu0 0
    %613 = vmatpush1.bf16.msra.mxu0 %v461
    %614 = vmatprep.subr.bf16.mxu0 0
    %615 = vmatpush1.bf16.msra.mxu0 %v462
    %616 = vmatprep.subr.bf16.mxu0 0
    %617 = vmatpush1.bf16.msra.mxu0 %v463
    %618 = vmatprep.subr.bf16.mxu0 0
    %619 = vmatpush1.bf16.msra.mxu0 %v464
    %620 = vmatprep.subr.bf16.mxu0 0
    %621 = vmatpush1.bf16.msra.mxu0 %v465
    %622 = vmatprep.subr.bf16.mxu0 0
    %623 = vmatpush1.bf16.msra.mxu0 %v466
    %624 = vmatprep.subr.bf16.mxu0 0
    %625 = vmatpush1.bf16.msra.mxu0 %v467
    %626 = vmatprep.subr.bf16.mxu0 0
    %627 = vmatpush1.bf16.msra.mxu0 %v468
    %628 = vmatprep.subr.bf16.mxu0 0
    %629 = vmatpush1.bf16.msra.mxu0 %v469
    %630 = vmatprep.mubr.bf16.mxu0 %v126
    %631 = vmatmul.mubr.bf16.gmra.mrb[0].mxu0 %v125
    %v632 = vpop.f32.mrb[0].mxu0
    %v633 = vadd.f32 %v593, %v632
    %v634 = vpop.f32.mrb[0].mxu0
    %v635 = vpop.f32.mrb[0].mxu0
    %v636 = vpop.f32.mrb[0].mxu0
    %637 = vdwg.mxu0
    %v638 = vpack.c.bf16 %v633, %v633
    %v639 = vld [vmem:[#allocation8] sm:$0xff]
    %v640 = vld [vmem:[#allocation8 + $0x8] sm:$0xf]
    %v641 = vld [vmem:[#allocation8 + $0xc] sm:$0xff]
    %v642 = vld [vmem:[#allocation8 + $0x14] sm:$0xf]
    %v643 = vld [vmem:[#allocation8 + $0x18] sm:$0xff]
    %v644 = vld [vmem:[#allocation8 + $0x20] sm:$0xf]
    %v645 = vld [vmem:[#allocation8 + $0x24] sm:$0xff]
    %v646 = vld [vmem:[#allocation8 + $0x2c] sm:$0xf]
    %v647 = vld [vmem:[#allocation8 + $0x30] sm:$0xff]
    %v648 = vld [vmem:[#allocation8 + $0x38] sm:$0xf]
    %v649 = vld [vmem:[#allocation8 + $0x3c] sm:$0xff]
    %v650 = vld [vmem:[#allocation8 + $0x44] sm:$0xf]
    %v651 = vld [vmem:[#allocation8 + $0x48] sm:$0xff]
    %v652 = vld [vmem:[#allocation8 + $0x50] sm:$0xf]
    %v653 = vld [vmem:[#allocation8 + $0x54] sm:$0xff]
    %v654 = vld [vmem:[#allocation8 + $0x5c] sm:$0xf]
    %v655 = vld [vmem:[#allocation8 + $0x60] sm:$0xff]
    %v656 = vld [vmem:[#allocation8 + $0x68] sm:$0xf]
    %v657 = vld [vmem:[#allocation8 + $0x6c] sm:$0xff]
    %v658 = vld [vmem:[#allocation8 + $0x74] sm:$0xf]
    %v659 = vld [vmem:[#allocation8 + $0x78] sm:$0xff]
    %v660 = vld [vmem:[#allocation8 + $0x80] sm:$0xf]
    %v661 = vld [vmem:[#allocation8 + $0x84] sm:$0xff]
    %v662 = vld [vmem:[#allocation8 + $0x8c] sm:$0xf]
    %v663 = vld [vmem:[#allocation8 + $0x90] sm:$0xff]
    %v664 = vld [vmem:[#allocation8 + $0x98] sm:$0xf]
    %v665 = vld [vmem:[#allocation8 + $0x9c] sm:$0xff]
    %v666 = vld [vmem:[#allocation8 + $0xa4] sm:$0xf]
    %v667 = vld [vmem:[#allocation8 + $0xa8] sm:$0xff]
    %v668 = vld [vmem:[#allocation8 + $0xb0] sm:$0xf]
    %v669 = vld [vmem:[#allocation8 + $0xb4] sm:$0xff]
    %v670 = vld [vmem:[#allocation8 + $0xbc] sm:$0xf]
    %v671 = vld [vmem:[#allocation10] sm:$0x7]
    %v673 = vlaneseq
    %v674 = vshrl.u32 %v673, 7
    %v675 = vsub.s32 0, %v674
    %v676 = vrot.slane %v671, %v675
    %v677 = vlaneseq
    %v678 = vshrl.u32 %v677, 7
    %v679 = vsub.s32 1, %v678
    %v680 = vrot.slane %v671, %v679
    %v681 = vlaneseq
    %v682 = vshrl.u32 %v681, 7
    %v683 = vsub.s32 2, %v682
    %v684 = vrot.slane %v671, %v683
    %v720 = vunpack.c.l.b16 %v639
    %v721 = vunpack.c.h.b16 %v639
    %v722 = vunpack.c.l.b16 %v640
    %v723 = vunpack.c.l.b16 %v641
    %v724 = vunpack.c.h.b16 %v641
    %v725 = vunpack.c.l.b16 %v642
    %v726 = vunpack.c.l.b16 %v643
    %v727 = vunpack.c.h.b16 %v643
    %v728 = vunpack.c.l.b16 %v644
    %v729 = vunpack.c.l.b16 %v645
    %v730 = vunpack.c.h.b16 %v645
    %v731 = vunpack.c.l.b16 %v646
    %v732 = vunpack.c.l.b16 %v647
    %v733 = vunpack.c.h.b16 %v647
    %v734 = vunpack.c.l.b16 %v648
    %v735 = vunpack.c.l.b16 %v649
    %v736 = vunpack.c.h.b16 %v649
    %v737 = vunpack.c.l.b16 %v650
    %v738 = vunpack.c.l.b16 %v651
    %v739 = vunpack.c.h.b16 %v651
    %v740 = vunpack.c.l.b16 %v652
    %v741 = vunpack.c.l.b16 %v653
    %v742 = vunpack.c.h.b16 %v653
    %v743 = vunpack.c.l.b16 %v654
    %v744 = vunpack.c.l.b16 %v655
    %v745 = vunpack.c.h.b16 %v655
    %v746 = vunpack.c.l.b16 %v656
    %v747 = vunpack.c.l.b16 %v657
    %v748 = vunpack.c.h.b16 %v657
    %v749 = vunpack.c.l.b16 %v658
    %v750 = vunpack.c.l.b16 %v659
    %v751 = vunpack.c.h.b16 %v659
    %v752 = vunpack.c.l.b16 %v660
    %v753 = vunpack.c.l.b16 %v661
    %v754 = vunpack.c.h.b16 %v661
    %v755 = vunpack.c.l.b16 %v662
    %v756 = vunpack.c.l.b16 %v663
    %v757 = vunpack.c.h.b16 %v663
    %v758 = vunpack.c.l.b16 %v664
    %v759 = vunpack.c.l.b16 %v665
    %v760 = vunpack.c.h.b16 %v665
    %v761 = vunpack.c.l.b16 %v666
    %v762 = vunpack.c.l.b16 %v667
    %v763 = vunpack.c.h.b16 %v667
    %v764 = vunpack.c.l.b16 %v668
    %v765 = vunpack.c.l.b16 %v669
    %v766 = vunpack.c.h.b16 %v669
    %v767 = vunpack.c.l.b16 %v670
    %v768 = vpack.c.b16 %v723, %v720
    %v769 = vpack.c.b16 %v724, %v721
    %v770 = vpack.c.b16 %v725, %v722
    %v771 = vpack.c.b16 %v729, %v726
    %v772 = vpack.c.b16 %v730, %v727
    %v773 = vpack.c.b16 %v731, %v728
    %v774 = vpack.c.b16 %v735, %v732
    %v775 = vpack.c.b16 %v736, %v733
    %v776 = vpack.c.b16 %v737, %v734
    %v777 = vpack.c.b16 %v741, %v738
    %v778 = vpack.c.b16 %v742, %v739
    %v779 = vpack.c.b16 %v743, %v740
    %v780 = vpack.c.b16 %v747, %v744
    %v781 = vpack.c.b16 %v748, %v745
    %v782 = vpack.c.b16 %v749, %v746
    %v783 = vpack.c.b16 %v753, %v750
    %v784 = vpack.c.b16 %v754, %v751
    %v785 = vpack.c.b16 %v755, %v752
    %v786 = vpack.c.b16 %v759, %v756
    %v787 = vpack.c.b16 %v760, %v757
    %v788 = vpack.c.b16 %v761, %v758
    %v789 = vpack.c.b16 %v765, %v762
    %v790 = vpack.c.b16 %v766, %v763
    %v791 = vpack.c.b16 %v767, %v764
    %816 = vmatprep.subr.bf16.mxu0 %v769
    %817 = vmatpush1.bf16.msra.mxu0 %v768
    %818 = vmatprep.subr.bf16.mxu0 %v772
    %819 = vmatpush1.bf16.msra.mxu0 %v771
    %820 = vmatprep.subr.bf16.mxu0 %v775
    %821 = vmatpush1.bf16.msra.mxu0 %v774
    %822 = vmatprep.subr.bf16.mxu0 %v778
    %823 = vmatpush1.bf16.msra.mxu0 %v777
    %824 = vmatprep.subr.bf16.mxu0 %v781
    %825 = vmatpush1.bf16.msra.mxu0 %v780
    %826 = vmatprep.subr.bf16.mxu0 %v784
    %827 = vmatpush1.bf16.msra.mxu0 %v783
    %828 = vmatprep.subr.bf16.mxu0 %v787
    %829 = vmatpush1.bf16.msra.mxu0 %v786
    %830 = vmatprep.subr.bf16.mxu0 %v790
    %831 = vmatpush1.bf16.msra.mxu0 %v789
    %832 = vmatprep.subr.bf16.mxu0 0
    %833 = vmatpush1.bf16.msra.mxu0 0
    %834 = vmatprep.subr.bf16.mxu0 0
    %835 = vmatpush1.bf16.msra.mxu0 0
    %836 = vmatprep.subr.bf16.mxu0 0
    %837 = vmatpush1.bf16.msra.mxu0 0
    %838 = vmatprep.subr.bf16.mxu0 0
    %839 = vmatpush1.bf16.msra.mxu0 0
    %840 = vmatprep.subr.bf16.mxu0 0
    %841 = vmatpush1.bf16.msra.mxu0 0
    %842 = vmatprep.subr.bf16.mxu0 0
    %843 = vmatpush1.bf16.msra.mxu0 0
    %844 = vmatprep.subr.bf16.mxu0 0
    %845 = vmatpush1.bf16.msra.mxu0 0
    %846 = vmatprep.subr.bf16.mxu0 0
    %847 = vmatpush1.bf16.msra.mxu0 0
    %848 = vmatprep.mubr.bf16.mxu0 0
    %849 = vmatmul.mubr.bf16.gmra.mrb[0].mxu0 %v638
    %v850 = vpop.f32.mrb[0].mxu0
    %v851 = vadd.f32 %v676, %v850
    %v852 = vpop.f32.mrb[0].mxu0
    %v853 = vadd.f32 %v680, %v852
    %v854 = vpop.f32.mrb[0].mxu0
    %v855 = vpop.f32.mrb[0].mxu0
    %856 = vdwg.mxu0
    %857 = vmatprep.subr.bf16.mxu0 0
    %858 = vmatpush1.bf16.msra.mxu0 %v770
    %859 = vmatprep.subr.bf16.mxu0 0
    %860 = vmatpush1.bf16.msra.mxu0 %v773
    %861 = vmatprep.subr.bf16.mxu0 0
    %862 = vmatpush1.bf16.msra.mxu0 %v776
    %863 = vmatprep.subr.bf16.mxu0 0
    %864 = vmatpush1.bf16.msra.mxu0 %v779
    %865 = vmatprep.subr.bf16.mxu0 0
    %866 = vmatpush1.bf16.msra.mxu0 %v782
    %867 = vmatprep.subr.bf16.mxu0 0
    %868 = vmatpush1.bf16.msra.mxu0 %v785
    %869 = vmatprep.subr.bf16.mxu0 0
    %870 = vmatpush1.bf16.msra.mxu0 %v788
    %871 = vmatprep.subr.bf16.mxu0 0
    %872 = vmatpush1.bf16.msra.mxu0 %v791
    %873 = vmatprep.subr.bf16.mxu0 0
    %874 = vmatpush1.bf16.msra.mxu0 0
    %875 = vmatprep.subr.bf16.mxu0 0
    %876 = vmatpush1.bf16.msra.mxu0 0
    %877 = vmatprep.subr.bf16.mxu0 0
    %878 = vmatpush1.bf16.msra.mxu0 0
    %879 = vmatprep.subr.bf16.mxu0 0
    %880 = vmatpush1.bf16.msra.mxu0 0
    %881 = vmatprep.subr.bf16.mxu0 0
    %882 = vmatpush1.bf16.msra.mxu0 0
    %883 = vmatprep.subr.bf16.mxu0 0
    %884 = vmatpush1.bf16.msra.mxu0 0
    %885 = vmatprep.subr.bf16.mxu0 0
    %886 = vmatpush1.bf16.msra.mxu0 0
    %887 = vmatprep.subr.bf16.mxu0 0
    %888 = vmatpush1.bf16.msra.mxu0 0
    %889 = vmatprep.mubr.bf16.mxu0 0
    %890 = vmatmul.mubr.bf16.gmra.mrb[0].mxu0 %v638
    %v891 = vpop.f32.mrb[0].mxu0
    %v892 = vadd.f32 %v684, %v891
    %v893 = vpop.f32.mrb[0].mxu0
    %v894 = vpop.f32.mrb[0].mxu0
    %v895 = vpop.f32.mrb[0].mxu0
    %896 = vdwg.mxu0
    %v897 = vtanh.pop %v851
    %v898 = vtanh.pop %v853
    %v899 = vtanh.pop %v892
    %v900 = vpack.c.bf16 %v897, %v897
    %v901 = vpack.c.bf16 %v898, %v898
    %v902 = vpack.c.bf16 %v899, %v899
    %v903 = vld [vmem:[#allocation11] sm:$0xff]
    %v904 = vld [vmem:[#allocation11 + $0x8] sm:$0xff]
    %v905 = vld [vmem:[#allocation11 + $0x10] sm:$0xf]
    %v906 = vld [vmem:[#allocation11 + $0x14] sm:$0xff]
    %v907 = vld [vmem:[#allocation11 + $0x1c] sm:$0xff]
    %v908 = vld [vmem:[#allocation11 + $0x24] sm:$0xf]
    %v909 = vld [vmem:[#allocation11 + $0x28] sm:$0xff]
    %v910 = vld [vmem:[#allocation11 + $0x30] sm:$0xff]
    %v911 = vld [vmem:[#allocation11 + $0x38] sm:$0xf]
    %v912 = vld [vmem:[#allocation11 + $0x3c] sm:$0xff]
    %v913 = vld [vmem:[#allocation11 + $0x44] sm:$0xff]
    %v914 = vld [vmem:[#allocation11 + $0x4c] sm:$0xf]
    %v915 = vld [vmem:[#allocation11 + $0x50] sm:$0xff]
    %v916 = vld [vmem:[#allocation11 + $0x58] sm:$0xff]
    %v917 = vld [vmem:[#allocation11 + $0x60] sm:$0xf]
    %v918 = vld [vmem:[#allocation11 + $0x64] sm:$0xff]
    %v919 = vld [vmem:[#allocation11 + $0x6c] sm:$0xff]
    %v920 = vld [vmem:[#allocation11 + $0x74] sm:$0xf]
    %v921 = vld [vmem:[#allocation11 + $0x78] sm:$0xff]
    %v922 = vld [vmem:[#allocation11 + $0x80] sm:$0xff]
    %v923 = vld [vmem:[#allocation11 + $0x88] sm:$0xf]
    %v924 = vld [vmem:[#allocation11 + $0x8c] sm:$0xff]
    %v925 = vld [vmem:[#allocation11 + $0x94] sm:$0xff]
    %v926 = vld [vmem:[#allocation11 + $0x9c] sm:$0xf]
    %v927 = vld [vmem:[#allocation11 + $0xa0] sm:$0xff]
    %v928 = vld [vmem:[#allocation11 + $0xa8] sm:$0xff]
    %v929 = vld [vmem:[#allocation11 + $0xb0] sm:$0xf]
    %v930 = vld [vmem:[#allocation11 + $0xb4] sm:$0xff]
    %v931 = vld [vmem:[#allocation11 + $0xbc] sm:$0xff]
    %v932 = vld [vmem:[#allocation11 + $0xc4] sm:$0xf]
    %v933 = vld [vmem:[#allocation11 + $0xc8] sm:$0xff]
    %v934 = vld [vmem:[#allocation11 + $0xd0] sm:$0xff]
    %v935 = vld [vmem:[#allocation11 + $0xd8] sm:$0xf]
    %v936 = vld [vmem:[#allocation11 + $0xdc] sm:$0xff]
    %v937 = vld [vmem:[#allocation11 + $0xe4] sm:$0xff]
    %v938 = vld [vmem:[#allocation11 + $0xec] sm:$0xf]
    %v939 = vld [vmem:[#allocation11 + $0xf0] sm:$0xff]
    %v940 = vld [vmem:[#allocation11 + $0xf8] sm:$0xff]
    %v941 = vld [vmem:[#allocation11 + $0x100] sm:$0xf]
    %v942 = vld [vmem:[#allocation11 + $0x104] sm:$0xff]
    %v943 = vld [vmem:[#allocation11 + $0x10c] sm:$0xff]
    %v944 = vld [vmem:[#allocation11 + $0x114] sm:$0xf]
    %v945 = vld [vmem:[#allocation11 + $0x118] sm:$0xff]
    %v946 = vld [vmem:[#allocation11 + $0x120] sm:$0xff]
    %v947 = vld [vmem:[#allocation11 + $0x128] sm:$0xf]
    %v948 = vld [vmem:[#allocation11 + $0x12c] sm:$0xff]
    %v949 = vld [vmem:[#allocation11 + $0x134] sm:$0xff]
    %v950 = vld [vmem:[#allocation11 + $0x13c] sm:$0xf]
    %v951 = vld [vmem:[#allocation11 + $0x140] sm:$0xff]
    %v952 = vld [vmem:[#allocation11 + $0x148] sm:$0xff]
    %v953 = vld [vmem:[#allocation11 + $0x150] sm:$0xf]
    %v954 = vld [vmem:[#allocation11 + $0x154] sm:$0xff]
    %v955 = vld [vmem:[#allocation11 + $0x15c] sm:$0xff]
    %v956 = vld [vmem:[#allocation11 + $0x164] sm:$0xf]
    %v957 = vld [vmem:[#allocation11 + $0x168] sm:$0xff]
    %v958 = vld [vmem:[#allocation11 + $0x170] sm:$0xff]
    %v959 = vld [vmem:[#allocation11 + $0x178] sm:$0xf]
    %v960 = vld [vmem:[#allocation11 + $0x17c] sm:$0xff]
    %v961 = vld [vmem:[#allocation11 + $0x184] sm:$0xff]
    %v962 = vld [vmem:[#allocation11 + $0x18c] sm:$0xf]
    %v963 = vld [vmem:[#allocation11 + $0x190] sm:$0xff]
    %v964 = vld [vmem:[#allocation11 + $0x198] sm:$0xff]
    %v965 = vld [vmem:[#allocation11 + $0x1a0] sm:$0xf]
    %v966 = vld [vmem:[#allocation11 + $0x1a4] sm:$0xff]
    %v967 = vld [vmem:[#allocation11 + $0x1ac] sm:$0xff]
    %v968 = vld [vmem:[#allocation11 + $0x1b4] sm:$0xf]
    %v969 = vld [vmem:[#allocation11 + $0x1b8] sm:$0xff]
    %v970 = vld [vmem:[#allocation11 + $0x1c0] sm:$0xff]
    %v971 = vld [vmem:[#allocation11 + $0x1c8] sm:$0xf]
    %v972 = vld [vmem:[#allocation11 + $0x1cc] sm:$0xff]
    %v973 = vld [vmem:[#allocation11 + $0x1d4] sm:$0xff]
    %v974 = vld [vmem:[#allocation11 + $0x1dc] sm:$0xf]
    %v975 = vld [vmem:[#allocation11 + $0x1e0] sm:$0xff]
    %v976 = vld [vmem:[#allocation11 + $0x1e8] sm:$0xff]
    %v977 = vld [vmem:[#allocation11 + $0x1f0] sm:$0xf]
    %v978 = vld [vmem:[#allocation11 + $0x1f4] sm:$0xff]
    %v979 = vld [vmem:[#allocation11 + $0x1fc] sm:$0xff]
    %v980 = vld [vmem:[#allocation11 + $0x204] sm:$0xf]
    %v981 = vld [vmem:[#allocation11 + $0x208] sm:$0xff]
    %v982 = vld [vmem:[#allocation11 + $0x210] sm:$0xff]
    %v983 = vld [vmem:[#allocation11 + $0x218] sm:$0xf]
    %v984 = vld [vmem:[#allocation11 + $0x21c] sm:$0xff]
    %v985 = vld [vmem:[#allocation11 + $0x224] sm:$0xff]
    %v986 = vld [vmem:[#allocation11 + $0x22c] sm:$0xf]
    %v987 = vld [vmem:[#allocation11 + $0x230] sm:$0xff]
    %v988 = vld [vmem:[#allocation11 + $0x238] sm:$0xff]
    %v989 = vld [vmem:[#allocation11 + $0x240] sm:$0xf]
    %v990 = vld [vmem:[#allocation11 + $0x244] sm:$0xff]
    %v991 = vld [vmem:[#allocation11 + $0x24c] sm:$0xff]
    %v992 = vld [vmem:[#allocation11 + $0x254] sm:$0xf]
    %v993 = vld [vmem:[#allocation11 + $0x258] sm:$0xff]
    %v994 = vld [vmem:[#allocation11 + $0x260] sm:$0xff]
    %v995 = vld [vmem:[#allocation11 + $0x268] sm:$0xf]
    %v996 = vld [vmem:[#allocation11 + $0x26c] sm:$0xff]
    %v997 = vld [vmem:[#allocation11 + $0x274] sm:$0xff]
    %v998 = vld [vmem:[#allocation11 + $0x27c] sm:$0xf]
    %v999 = vld [vmem:[#allocation11 + $0x280] sm:$0xff]
    %v1000 = vld [vmem:[#allocation11 + $0x288] sm:$0xff]
    %v1001 = vld [vmem:[#allocation11 + $0x290] sm:$0xf]
    %v1002 = vld [vmem:[#allocation11 + $0x294] sm:$0xff]
    %v1003 = vld [vmem:[#allocation11 + $0x29c] sm:$0xff]
    %v1004 = vld [vmem:[#allocation11 + $0x2a4] sm:$0xf]
    %v1005 = vld [vmem:[#allocation11 + $0x2a8] sm:$0xff]
    %v1006 = vld [vmem:[#allocation11 + $0x2b0] sm:$0xff]
    %v1007 = vld [vmem:[#allocation11 + $0x2b8] sm:$0xf]
    %v1008 = vld [vmem:[#allocation11 + $0x2bc] sm:$0xff]
    %v1009 = vld [vmem:[#allocation11 + $0x2c4] sm:$0xff]
    %v1010 = vld [vmem:[#allocation11 + $0x2cc] sm:$0xf]
    %v1011 = vld [vmem:[#allocation11 + $0x2d0] sm:$0xff]
    %v1012 = vld [vmem:[#allocation11 + $0x2d8] sm:$0xff]
    %v1013 = vld [vmem:[#allocation11 + $0x2e0] sm:$0xf]
    %v1014 = vld [vmem:[#allocation11 + $0x2e4] sm:$0xff]
    %v1015 = vld [vmem:[#allocation11 + $0x2ec] sm:$0xff]
    %v1016 = vld [vmem:[#allocation11 + $0x2f4] sm:$0xf]
    %v1017 = vld [vmem:[#allocation11 + $0x2f8] sm:$0xff]
    %v1018 = vld [vmem:[#allocation11 + $0x300] sm:$0xff]
    %v1019 = vld [vmem:[#allocation11 + $0x308] sm:$0xf]
    %v1020 = vld [vmem:[#allocation11 + $0x30c] sm:$0xff]
    %v1021 = vld [vmem:[#allocation11 + $0x314] sm:$0xff]
    %v1022 = vld [vmem:[#allocation11 + $0x31c] sm:$0xf]
    %v1023 = vld [vmem:[#allocation13] sm:$0x1f]
    %v1025 = vlaneseq
    %v1026 = vshrl.u32 %v1025, 7
    %v1027 = vsub.s32 0, %v1026
    %v1028 = vrot.slane %v1023, %v1027
    %v1029 = vlaneseq
    %v1030 = vshrl.u32 %v1029, 7
    %v1031 = vsub.s32 1, %v1030
    %v1032 = vrot.slane %v1023, %v1031
    %v1033 = vlaneseq
    %v1034 = vshrl.u32 %v1033, 7
    %v1035 = vsub.s32 2, %v1034
    %v1036 = vrot.slane %v1023, %v1035
    %v1037 = vlaneseq
    %v1038 = vshrl.u32 %v1037, 7
    %v1039 = vsub.s32 3, %v1038
    %v1040 = vrot.slane %v1023, %v1039
    %v1041 = vlaneseq
    %v1042 = vshrl.u32 %v1041, 7
    %v1043 = vsub.s32 4, %v1042
    %v1044 = vrot.slane %v1023, %v1043
    %v1170 = vunpack.c.l.b16 %v903
    %v1171 = vunpack.c.h.b16 %v903
    %v1172 = vunpack.c.l.b16 %v904
    %v1173 = vunpack.c.h.b16 %v904
    %v1174 = vunpack.c.l.b16 %v905
    %v1175 = vunpack.c.l.b16 %v906
    %v1176 = vunpack.c.h.b16 %v906
    %v1177 = vunpack.c.l.b16 %v907
    %v1178 = vunpack.c.h.b16 %v907
    %v1179 = vunpack.c.l.b16 %v908
    %v1180 = vunpack.c.l.b16 %v909
    %v1181 = vunpack.c.h.b16 %v909
    %v1182 = vunpack.c.l.b16 %v910
    %v1183 = vunpack.c.h.b16 %v910
    %v1184 = vunpack.c.l.b16 %v911
    %v1185 = vunpack.c.l.b16 %v912
    %v1186 = vunpack.c.h.b16 %v912
    %v1187 = vunpack.c.l.b16 %v913
    %v1188 = vunpack.c.h.b16 %v913
    %v1189 = vunpack.c.l.b16 %v914
    %v1190 = vunpack.c.l.b16 %v915
    %v1191 = vunpack.c.h.b16 %v915
    %v1192 = vunpack.c.l.b16 %v916
    %v1193 = vunpack.c.h.b16 %v916
    %v1194 = vunpack.c.l.b16 %v917
    %v1195 = vunpack.c.l.b16 %v918
    %v1196 = vunpack.c.h.b16 %v918
    %v1197 = vunpack.c.l.b16 %v919
    %v1198 = vunpack.c.h.b16 %v919
    %v1199 = vunpack.c.l.b16 %v920
    %v1200 = vunpack.c.l.b16 %v921
    %v1201 = vunpack.c.h.b16 %v921
    %v1202 = vunpack.c.l.b16 %v922
    %v1203 = vunpack.c.h.b16 %v922
    %v1204 = vunpack.c.l.b16 %v923
    %v1205 = vunpack.c.l.b16 %v924
    %v1206 = vunpack.c.h.b16 %v924
    %v1207 = vunpack.c.l.b16 %v925
    %v1208 = vunpack.c.h.b16 %v925
    %v1209 = vunpack.c.l.b16 %v926
    %v1210 = vunpack.c.l.b16 %v927
    %v1211 = vunpack.c.h.b16 %v927
    %v1212 = vunpack.c.l.b16 %v928
    %v1213 = vunpack.c.h.b16 %v928
    %v1214 = vunpack.c.l.b16 %v929
    %v1215 = vunpack.c.l.b16 %v930
    %v1216 = vunpack.c.h.b16 %v930
    %v1217 = vunpack.c.l.b16 %v931
    %v1218 = vunpack.c.h.b16 %v931
    %v1219 = vunpack.c.l.b16 %v932
    %v1220 = vunpack.c.l.b16 %v933
    %v1221 = vunpack.c.h.b16 %v933
    %v1222 = vunpack.c.l.b16 %v934
    %v1223 = vunpack.c.h.b16 %v934
    %v1224 = vunpack.c.l.b16 %v935
    %v1225 = vunpack.c.l.b16 %v936
    %v1226 = vunpack.c.h.b16 %v936
    %v1227 = vunpack.c.l.b16 %v937
    %v1228 = vunpack.c.h.b16 %v937
    %v1229 = vunpack.c.l.b16 %v938
    %v1230 = vunpack.c.l.b16 %v939
    %v1231 = vunpack.c.h.b16 %v939
    %v1232 = vunpack.c.l.b16 %v940
    %v1233 = vunpack.c.h.b16 %v940
    %v1234 = vunpack.c.l.b16 %v941
    %v1235 = vunpack.c.l.b16 %v942
    %v1236 = vunpack.c.h.b16 %v942
    %v1237 = vunpack.c.l.b16 %v943
    %v1238 = vunpack.c.h.b16 %v943
    %v1239 = vunpack.c.l.b16 %v944
    %v1240 = vunpack.c.l.b16 %v945
    %v1241 = vunpack.c.h.b16 %v945
    %v1242 = vunpack.c.l.b16 %v946
    %v1243 = vunpack.c.h.b16 %v946
    %v1244 = vunpack.c.l.b16 %v947
    %v1245 = vunpack.c.l.b16 %v948
    %v1246 = vunpack.c.h.b16 %v948
    %v1247 = vunpack.c.l.b16 %v949
    %v1248 = vunpack.c.h.b16 %v949
    %v1249 = vunpack.c.l.b16 %v950
    %v1250 = vunpack.c.l.b16 %v951
    %v1251 = vunpack.c.h.b16 %v951
    %v1252 = vunpack.c.l.b16 %v952
    %v1253 = vunpack.c.h.b16 %v952
    %v1254 = vunpack.c.l.b16 %v953
    %v1255 = vunpack.c.l.b16 %v954
    %v1256 = vunpack.c.h.b16 %v954
    %v1257 = vunpack.c.l.b16 %v955
    %v1258 = vunpack.c.h.b16 %v955
    %v1259 = vunpack.c.l.b16 %v956
    %v1260 = vunpack.c.l.b16 %v957
    %v1261 = vunpack.c.h.b16 %v957
    %v1262 = vunpack.c.l.b16 %v958
    %v1263 = vunpack.c.h.b16 %v958
    %v1264 = vunpack.c.l.b16 %v959
    %v1265 = vunpack.c.l.b16 %v960
    %v1266 = vunpack.c.h.b16 %v960
    %v1267 = vunpack.c.l.b16 %v961
    %v1268 = vunpack.c.h.b16 %v961
    %v1269 = vunpack.c.l.b16 %v962
    %v1270 = vunpack.c.l.b16 %v963
    %v1271 = vunpack.c.h.b16 %v963
    %v1272 = vunpack.c.l.b16 %v964
    %v1273 = vunpack.c.h.b16 %v964
    %v1274 = vunpack.c.l.b16 %v965
    %v1275 = vunpack.c.l.b16 %v966
    %v1276 = vunpack.c.h.b16 %v966
    %v1277 = vunpack.c.l.b16 %v967
    %v1278 = vunpack.c.h.b16 %v967
    %v1279 = vunpack.c.l.b16 %v968
    %v1280 = vunpack.c.l.b16 %v969
    %v1281 = vunpack.c.h.b16 %v969
    %v1282 = vunpack.c.l.b16 %v970
    %v1283 = vunpack.c.h.b16 %v970
    %v1284 = vunpack.c.l.b16 %v971
    %v1285 = vunpack.c.l.b16 %v972
    %v1286 = vunpack.c.h.b16 %v972
    %v1287 = vunpack.c.l.b16 %v973
    %v1288 = vunpack.c.h.b16 %v973
    %v1289 = vunpack.c.l.b16 %v974
    %v1290 = vunpack.c.l.b16 %v975
    %v1291 = vunpack.c.h.b16 %v975
    %v1292 = vunpack.c.l.b16 %v976
    %v1293 = vunpack.c.h.b16 %v976
    %v1294 = vunpack.c.l.b16 %v977
    %v1295 = vunpack.c.l.b16 %v978
    %v1296 = vunpack.c.h.b16 %v978
    %v1297 = vunpack.c.l.b16 %v979
    %v1298 = vunpack.c.h.b16 %v979
    %v1299 = vunpack.c.l.b16 %v980
    %v1300 = vunpack.c.l.b16 %v981
    %v1301 = vunpack.c.h.b16 %v981
    %v1302 = vunpack.c.l.b16 %v982
    %v1303 = vunpack.c.h.b16 %v982
    %v1304 = vunpack.c.l.b16 %v983
    %v1305 = vunpack.c.l.b16 %v984
    %v1306 = vunpack.c.h.b16 %v984
    %v1307 = vunpack.c.l.b16 %v985
    %v1308 = vunpack.c.h.b16 %v985
    %v1309 = vunpack.c.l.b16 %v986
    %v1310 = vunpack.c.l.b16 %v987
    %v1311 = vunpack.c.h.b16 %v987
    %v1312 = vunpack.c.l.b16 %v988
    %v1313 = vunpack.c.h.b16 %v988
    %v1314 = vunpack.c.l.b16 %v989
    %v1315 = vunpack.c.l.b16 %v990
    %v1316 = vunpack.c.h.b16 %v990
    %v1317 = vunpack.c.l.b16 %v991
    %v1318 = vunpack.c.h.b16 %v991
    %v1319 = vunpack.c.l.b16 %v992
    %v1320 = vunpack.c.l.b16 %v993
    %v1321 = vunpack.c.h.b16 %v993
    %v1322 = vunpack.c.l.b16 %v994
    %v1323 = vunpack.c.h.b16 %v994
    %v1324 = vunpack.c.l.b16 %v995
    %v1325 = vunpack.c.l.b16 %v996
    %v1326 = vunpack.c.h.b16 %v996
    %v1327 = vunpack.c.l.b16 %v997
    %v1328 = vunpack.c.h.b16 %v997
    %v1329 = vunpack.c.l.b16 %v998
    %v1330 = vunpack.c.l.b16 %v999
    %v1331 = vunpack.c.h.b16 %v999
    %v1332 = vunpack.c.l.b16 %v1000
    %v1333 = vunpack.c.h.b16 %v1000
    %v1334 = vunpack.c.l.b16 %v1001
    %v1335 = vunpack.c.l.b16 %v1002
    %v1336 = vunpack.c.h.b16 %v1002
    %v1337 = vunpack.c.l.b16 %v1003
    %v1338 = vunpack.c.h.b16 %v1003
    %v1339 = vunpack.c.l.b16 %v1004
    %v1340 = vunpack.c.l.b16 %v1005
    %v1341 = vunpack.c.h.b16 %v1005
    %v1342 = vunpack.c.l.b16 %v1006
    %v1343 = vunpack.c.h.b16 %v1006
    %v1344 = vunpack.c.l.b16 %v1007
    %v1345 = vunpack.c.l.b16 %v1008
    %v1346 = vunpack.c.h.b16 %v1008
    %v1347 = vunpack.c.l.b16 %v1009
    %v1348 = vunpack.c.h.b16 %v1009
    %v1349 = vunpack.c.l.b16 %v1010
    %v1350 = vunpack.c.l.b16 %v1011
    %v1351 = vunpack.c.h.b16 %v1011
    %v1352 = vunpack.c.l.b16 %v1012
    %v1353 = vunpack.c.h.b16 %v1012
    %v1354 = vunpack.c.l.b16 %v1013
    %v1355 = vunpack.c.l.b16 %v1014
    %v1356 = vunpack.c.h.b16 %v1014
    %v1357 = vunpack.c.l.b16 %v1015
    %v1358 = vunpack.c.h.b16 %v1015
    %v1359 = vunpack.c.l.b16 %v1016
    %v1360 = vunpack.c.l.b16 %v1017
    %v1361 = vunpack.c.h.b16 %v1017
    %v1362 = vunpack.c.l.b16 %v1018
    %v1363 = vunpack.c.h.b16 %v1018
    %v1364 = vunpack.c.l.b16 %v1019
    %v1365 = vunpack.c.l.b16 %v1020
    %v1366 = vunpack.c.h.b16 %v1020
    %v1367 = vunpack.c.l.b16 %v1021
    %v1368 = vunpack.c.h.b16 %v1021
    %v1369 = vunpack.c.l.b16 %v1022
    %v1370 = vpack.c.b16 %v1175, %v1170
    %v1371 = vpack.c.b16 %v1176, %v1171
    %v1372 = vpack.c.b16 %v1177, %v1172
    %v1373 = vpack.c.b16 %v1178, %v1173
    %v1374 = vpack.c.b16 %v1179, %v1174
    %v1375 = vpack.c.b16 %v1185, %v1180
    %v1376 = vpack.c.b16 %v1186, %v1181
    %v1377 = vpack.c.b16 %v1187, %v1182
    %v1378 = vpack.c.b16 %v1188, %v1183
    %v1379 = vpack.c.b16 %v1189, %v1184
    %v1380 = vpack.c.b16 %v1195, %v1190
    %v1381 = vpack.c.b16 %v1196, %v1191
    %v1382 = vpack.c.b16 %v1197, %v1192
    %v1383 = vpack.c.b16 %v1198, %v1193
    %v1384 = vpack.c.b16 %v1199, %v1194
    %v1385 = vpack.c.b16 %v1205, %v1200
    %v1386 = vpack.c.b16 %v1206, %v1201
    %v1387 = vpack.c.b16 %v1207, %v1202
    %v1388 = vpack.c.b16 %v1208, %v1203
    %v1389 = vpack.c.b16 %v1209, %v1204
    %v1390 = vpack.c.b16 %v1215, %v1210
    %v1391 = vpack.c.b16 %v1216, %v1211
    %v1392 = vpack.c.b16 %v1217, %v1212
    %v1393 = vpack.c.b16 %v1218, %v1213
    %v1394 = vpack.c.b16 %v1219, %v1214
    %v1395 = vpack.c.b16 %v1225, %v1220
    %v1396 = vpack.c.b16 %v1226, %v1221
    %v1397 = vpack.c.b16 %v1227, %v1222
    %v1398 = vpack.c.b16 %v1228, %v1223
    %v1399 = vpack.c.b16 %v1229, %v1224
    %v1400 = vpack.c.b16 %v1235, %v1230
    %v1401 = vpack.c.b16 %v1236, %v1231
    %v1402 = vpack.c.b16 %v1237, %v1232
    %v1403 = vpack.c.b16 %v1238, %v1233
    %v1404 = vpack.c.b16 %v1239, %v1234
    %v1405 = vpack.c.b16 %v1245, %v1240
    %v1406 = vpack.c.b16 %v1246, %v1241
    %v1407 = vpack.c.b16 %v1247, %v1242
    %v1408 = vpack.c.b16 %v1248, %v1243
    %v1409 = vpack.c.b16 %v1249, %v1244
    %v1410 = vpack.c.b16 %v1255, %v1250
    %v1411 = vpack.c.b16 %v1256, %v1251
    %v1412 = vpack.c.b16 %v1257, %v1252
    %v1413 = vpack.c.b16 %v1258, %v1253
    %v1414 = vpack.c.b16 %v1259, %v1254
    %v1415 = vpack.c.b16 %v1265, %v1260
    %v1416 = vpack.c.b16 %v1266, %v1261
    %v1417 = vpack.c.b16 %v1267, %v1262
    %v1418 = vpack.c.b16 %v1268, %v1263
    %v1419 = vpack.c.b16 %v1269, %v1264
    %v1420 = vpack.c.b16 %v1275, %v1270
    %v1421 = vpack.c.b16 %v1276, %v1271
    %v1422 = vpack.c.b16 %v1277, %v1272
    %v1423 = vpack.c.b16 %v1278, %v1273
    %v1424 = vpack.c.b16 %v1279, %v1274
    %v1425 = vpack.c.b16 %v1285, %v1280
    %v1426 = vpack.c.b16 %v1286, %v1281
    %v1427 = vpack.c.b16 %v1287, %v1282
    %v1428 = vpack.c.b16 %v1288, %v1283
    %v1429 = vpack.c.b16 %v1289, %v1284
    %v1430 = vpack.c.b16 %v1295, %v1290
    %v1431 = vpack.c.b16 %v1296, %v1291
    %v1432 = vpack.c.b16 %v1297, %v1292
    %v1433 = vpack.c.b16 %v1298, %v1293
    %v1434 = vpack.c.b16 %v1299, %v1294
    %v1435 = vpack.c.b16 %v1305, %v1300
    %v1436 = vpack.c.b16 %v1306, %v1301
    %v1437 = vpack.c.b16 %v1307, %v1302
    %v1438 = vpack.c.b16 %v1308, %v1303
    %v1439 = vpack.c.b16 %v1309, %v1304
    %v1440 = vpack.c.b16 %v1315, %v1310
    %v1441 = vpack.c.b16 %v1316, %v1311
    %v1442 = vpack.c.b16 %v1317, %v1312
    %v1443 = vpack.c.b16 %v1318, %v1313
    %v1444 = vpack.c.b16 %v1319, %v1314
    %v1445 = vpack.c.b16 %v1325, %v1320
    %v1446 = vpack.c.b16 %v1326, %v1321
    %v1447 = vpack.c.b16 %v1327, %v1322
    %v1448 = vpack.c.b16 %v1328, %v1323
    %v1449 = vpack.c.b16 %v1329, %v1324
    %v1450 = vpack.c.b16 %v1335, %v1330
    %v1451 = vpack.c.b16 %v1336, %v1331
    %v1452 = vpack.c.b16 %v1337, %v1332
    %v1453 = vpack.c.b16 %v1338, %v1333
    %v1454 = vpack.c.b16 %v1339, %v1334
    %v1455 = vpack.c.b16 %v1345, %v1340
    %v1456 = vpack.c.b16 %v1346, %v1341
    %v1457 = vpack.c.b16 %v1347, %v1342
    %v1458 = vpack.c.b16 %v1348, %v1343
    %v1459 = vpack.c.b16 %v1349, %v1344
    %v1460 = vpack.c.b16 %v1355, %v1350
    %v1461 = vpack.c.b16 %v1356, %v1351
    %v1462 = vpack.c.b16 %v1357, %v1352
    %v1463 = vpack.c.b16 %v1358, %v1353
    %v1464 = vpack.c.b16 %v1359, %v1354
    %v1465 = vpack.c.b16 %v1365, %v1360
    %v1466 = vpack.c.b16 %v1366, %v1361
    %v1467 = vpack.c.b16 %v1367, %v1362
    %v1468 = vpack.c.b16 %v1368, %v1363
    %v1469 = vpack.c.b16 %v1369, %v1364
    %vm1570 = vcmask 523264
    %v1572 = vsel %vm1570, %v902, 0
    %1574 = vmatprep.subr.bf16.mxu0 %v1371
    %1575 = vmatpush1.bf16.msra.mxu0 %v1370
    %1576 = vmatprep.subr.bf16.mxu0 %v1376
    %1577 = vmatpush1.bf16.msra.mxu0 %v1375
    %1578 = vmatprep.subr.bf16.mxu0 %v1381
    %1579 = vmatpush1.bf16.msra.mxu0 %v1380
    %1580 = vmatprep.subr.bf16.mxu0 %v1386
    %1581 = vmatpush1.bf16.msra.mxu0 %v1385
    %1582 = vmatprep.subr.bf16.mxu0 %v1391
    %1583 = vmatpush1.bf16.msra.mxu0 %v1390
    %1584 = vmatprep.subr.bf16.mxu0 %v1396
    %1585 = vmatpush1.bf16.msra.mxu0 %v1395
    %1586 = vmatprep.subr.bf16.mxu0 %v1401
    %1587 = vmatpush1.bf16.msra.mxu0 %v1400
    %1588 = vmatprep.subr.bf16.mxu0 %v1406
    %1589 = vmatpush1.bf16.msra.mxu0 %v1405
    %1590 = vmatprep.subr.bf16.mxu0 %v1411
    %1591 = vmatpush1.bf16.msra.mxu0 %v1410
    %1592 = vmatprep.subr.bf16.mxu0 %v1416
    %1593 = vmatpush1.bf16.msra.mxu0 %v1415
    %1594 = vmatprep.subr.bf16.mxu0 %v1421
    %1595 = vmatpush1.bf16.msra.mxu0 %v1420
    %1596 = vmatprep.subr.bf16.mxu0 %v1426
    %1597 = vmatpush1.bf16.msra.mxu0 %v1425
    %1598 = vmatprep.subr.bf16.mxu0 %v1431
    %1599 = vmatpush1.bf16.msra.mxu0 %v1430
    %1600 = vmatprep.subr.bf16.mxu0 %v1436
    %1601 = vmatpush1.bf16.msra.mxu0 %v1435
    %1602 = vmatprep.subr.bf16.mxu0 %v1441
    %1603 = vmatpush1.bf16.msra.mxu0 %v1440
    %1604 = vmatprep.subr.bf16.mxu0 %v1446
    %1605 = vmatpush1.bf16.msra.mxu0 %v1445
    %1606 = vmatprep.mubr.bf16.mxu0 %v901
    %1607 = vmatmul.mubr.bf16.gmra.mrb[0].mxu0 %v900
    %v1608 = vpop.f32.mrb[0].mxu0
    %v1609 = vadd.f32 %v1028, %v1608
    %v1610 = vpop.f32.mrb[0].mxu0
    %v1611 = vadd.f32 %v1032, %v1610
    %v1612 = vpop.f32.mrb[0].mxu0
    %v1613 = vpop.f32.mrb[0].mxu0
    %1614 = vdwg.mxu0
    %1615 = vmatprep.subr.bf16.mxu0 %v1451
    %1616 = vmatpush1.bf16.msra.mxu0 %v1450
    %1617 = vmatprep.subr.bf16.mxu0 %v1456
    %1618 = vmatpush1.bf16.msra.mxu0 %v1455
    %1619 = vmatprep.subr.bf16.mxu0 %v1461
    %1620 = vmatpush1.bf16.msra.mxu0 %v1460
    %1621 = vmatprep.subr.bf16.mxu0 %v1466
    %1622 = vmatpush1.bf16.msra.mxu0 %v1465
    %1623 = vmatprep.subr.bf16.mxu0 0
    %1624 = vmatpush1.bf16.msra.mxu0 0
    %1625 = vmatprep.subr.bf16.mxu0 0
    %1626 = vmatpush1.bf16.msra.mxu0 0
    %1627 = vmatprep.subr.bf16.mxu0 0
    %1628 = vmatpush1.bf16.msra.mxu0 0
    %1629 = vmatprep.subr.bf16.mxu0 0
    %1630 = vmatpush1.bf16.msra.mxu0 0
    %1631 = vmatprep.subr.bf16.mxu0 0
    %1632 = vmatpush1.bf16.msra.mxu0 0
    %1633 = vmatprep.subr.bf16.mxu0 0
    %1634 = vmatpush1.bf16.msra.mxu0 0
    %1635 = vmatprep.subr.bf16.mxu0 0
    %1636 = vmatpush1.bf16.msra.mxu0 0
    %1637 = vmatprep.subr.bf16.mxu0 0
    %1638 = vmatpush1.bf16.msra.mxu0 0
    %1639 = vmatprep.subr.bf16.mxu0 0
    %1640 = vmatpush1.bf16.msra.mxu0 0
    %1641 = vmatprep.subr.bf16.mxu0 0
    %1642 = vmatpush1.bf16.msra.mxu0 0
    %1643 = vmatprep.subr.bf16.mxu0 0
    %1644 = vmatpush1.bf16.msra.mxu0 0
    %1645 = vmatprep.subr.bf16.mxu0 0
    %1646 = vmatpush1.bf16.msra.mxu0 0
    %1647 = vmatprep.mubr.bf16.mxu0 0
    %1648 = vmatmul.mubr.bf16.gmra.mrb[0].mxu0 %v1572
    %v1649 = vpop.f32.mrb[0].mxu0
    %v1650 = vadd.f32 %v1609, %v1649
    %v1651 = vpop.f32.mrb[0].mxu0
    %v1652 = vadd.f32 %v1611, %v1651
    %v1653 = vpop.f32.mrb[0].mxu0
    %v1654 = vpop.f32.mrb[0].mxu0
    %1655 = vdwg.mxu0
    %1656 = vmatprep.subr.bf16.mxu0 %v1373
    %1657 = vmatpush1.bf16.msra.mxu0 %v1372
    %1658 = vmatprep.subr.bf16.mxu0 %v1378
    %1659 = vmatpush1.bf16.msra.mxu0 %v1377
    %1660 = vmatprep.subr.bf16.mxu0 %v1383
    %1661 = vmatpush1.bf16.msra.mxu0 %v1382
    %1662 = vmatprep.subr.bf16.mxu0 %v1388
    %1663 = vmatpush1.bf16.msra.mxu0 %v1387
    %1664 = vmatprep.subr.bf16.mxu0 %v1393
    %1665 = vmatpush1.bf16.msra.mxu0 %v1392
    %1666 = vmatprep.subr.bf16.mxu0 %v1398
    %1667 = vmatpush1.bf16.msra.mxu0 %v1397
    %1668 = vmatprep.subr.bf16.mxu0 %v1403
    %1669 = vmatpush1.bf16.msra.mxu0 %v1402
    %1670 = vmatprep.subr.bf16.mxu0 %v1408
    %1671 = vmatpush1.bf16.msra.mxu0 %v1407
    %1672 = vmatprep.subr.bf16.mxu0 %v1413
    %1673 = vmatpush1.bf16.msra.mxu0 %v1412
    %1674 = vmatprep.subr.bf16.mxu0 %v1418
    %1675 = vmatpush1.bf16.msra.mxu0 %v1417
    %1676 = vmatprep.subr.bf16.mxu0 %v1423
    %1677 = vmatpush1.bf16.msra.mxu0 %v1422
    %1678 = vmatprep.subr.bf16.mxu0 %v1428
    %1679 = vmatpush1.bf16.msra.mxu0 %v1427
    %1680 = vmatprep.subr.bf16.mxu0 %v1433
    %1681 = vmatpush1.bf16.msra.mxu0 %v1432
    %1682 = vmatprep.subr.bf16.mxu0 %v1438
    %1683 = vmatpush1.bf16.msra.mxu0 %v1437
    %1684 = vmatprep.subr.bf16.mxu0 %v1443
    %1685 = vmatpush1.bf16.msra.mxu0 %v1442
    %1686 = vmatprep.subr.bf16.mxu0 %v1448
    %1687 = vmatpush1.bf16.msra.mxu0 %v1447
    %1688 = vmatprep.mubr.bf16.mxu0 %v901
    %1689 = vmatmul.mubr.bf16.gmra.mrb[0].mxu0 %v900
    %v1690 = vpop.f32.mrb[0].mxu0
    %v1691 = vadd.f32 %v1036, %v1690
    %v1692 = vpop.f32.mrb[0].mxu0
    %v1693 = vadd.f32 %v1040, %v1692
    %v1694 = vpop.f32.mrb[0].mxu0
    %v1695 = vpop.f32.mrb[0].mxu0
    %1696 = vdwg.mxu0
    %1697 = vmatprep.subr.bf16.mxu0 %v1453
    %1698 = vmatpush1.bf16.msra.mxu0 %v1452
    %1699 = vmatprep.subr.bf16.mxu0 %v1458
    %1700 = vmatpush1.bf16.msra.mxu0 %v1457
    %1701 = vmatprep.subr.bf16.mxu0 %v1463
    %1702 = vmatpush1.bf16.msra.mxu0 %v1462
    %1703 = vmatprep.subr.bf16.mxu0 %v1468
    %1704 = vmatpush1.bf16.msra.mxu0 %v1467
    %1705 = vmatprep.subr.bf16.mxu0 0
    %1706 = vmatpush1.bf16.msra.mxu0 0
    %1707 = vmatprep.subr.bf16.mxu0 0
    %1708 = vmatpush1.bf16.msra.mxu0 0
    %1709 = vmatprep.subr.bf16.mxu0 0
    %1710 = vmatpush1.bf16.msra.mxu0 0
    %1711 = vmatprep.subr.bf16.mxu0 0
    %1712 = vmatpush1.bf16.msra.mxu0 0
    %1713 = vmatprep.subr.bf16.mxu0 0
    %1714 = vmatpush1.bf16.msra.mxu0 0
    %1715 = vmatprep.subr.bf16.mxu0 0
    %1716 = vmatpush1.bf16.msra.mxu0 0
    %1717 = vmatprep.subr.bf16.mxu0 0
    %1718 = vmatpush1.bf16.msra.mxu0 0
    %1719 = vmatprep.subr.bf16.mxu0 0
    %1720 = vmatpush1.bf16.msra.mxu0 0
    %1721 = vmatprep.subr.bf16.mxu0 0
    %1722 = vmatpush1.bf16.msra.mxu0 0
    %1723 = vmatprep.subr.bf16.mxu0 0
    %1724 = vmatpush1.bf16.msra.mxu0 0
    %1725 = vmatprep.subr.bf16.mxu0 0
    %1726 = vmatpush1.bf16.msra.mxu0 0
    %1727 = vmatprep.subr.bf16.mxu0 0
    %1728 = vmatpush1.bf16.msra.mxu0 0
    %1729 = vmatprep.mubr.bf16.mxu0 0
    %1730 = vmatmul.mubr.bf16.gmra.mrb[0].mxu0 %v1572
    %v1731 = vpop.f32.mrb[0].mxu0
    %v1732 = vadd.f32 %v1691, %v1731
    %v1733 = vpop.f32.mrb[0].mxu0
    %v1734 = vadd.f32 %v1693, %v1733
    %v1735 = vpop.f32.mrb[0].mxu0
    %v1736 = vpop.f32.mrb[0].mxu0
    %1737 = vdwg.mxu0
    %1738 = vmatprep.subr.bf16.mxu0 0
    %1739 = vmatpush1.bf16.msra.mxu0 %v1374
    %1740 = vmatprep.subr.bf16.mxu0 0
    %1741 = vmatpush1.bf16.msra.mxu0 %v1379
    %1742 = vmatprep.subr.bf16.mxu0 0
    %1743 = vmatpush1.bf16.msra.mxu0 %v1384
    %1744 = vmatprep.subr.bf16.mxu0 0
    %1745 = vmatpush1.bf16.msra.mxu0 %v1389
    %1746 = vmatprep.subr.bf16.mxu0 0
    %1747 = vmatpush1.bf16.msra.mxu0 %v1394
    %1748 = vmatprep.subr.bf16.mxu0 0
    %1749 = vmatpush1.bf16.msra.mxu0 %v1399
    %1750 = vmatprep.subr.bf16.mxu0 0
    %1751 = vmatpush1.bf16.msra.mxu0 %v1404
    %1752 = vmatprep.subr.bf16.mxu0 0
    %1753 = vmatpush1.bf16.msra.mxu0 %v1409
    %1754 = vmatprep.subr.bf16.mxu0 0
    %1755 = vmatpush1.bf16.msra.mxu0 %v1414
    %1756 = vmatprep.subr.bf16.mxu0 0
    %1757 = vmatpush1.bf16.msra.mxu0 %v1419
    %1758 = vmatprep.subr.bf16.mxu0 0
    %1759 = vmatpush1.bf16.msra.mxu0 %v1424
    %1760 = vmatprep.subr.bf16.mxu0 0
    %1761 = vmatpush1.bf16.msra.mxu0 %v1429
    %1762 = vmatprep.subr.bf16.mxu0 0
    %1763 = vmatpush1.bf16.msra.mxu0 %v1434
    %1764 = vmatprep.subr.bf16.mxu0 0
    %1765 = vmatpush1.bf16.msra.mxu0 %v1439
    %1766 = vmatprep.subr.bf16.mxu0 0
    %1767 = vmatpush1.bf16.msra.mxu0 %v1444
    %1768 = vmatprep.subr.bf16.mxu0 0
    %1769 = vmatpush1.bf16.msra.mxu0 %v1449
    %1770 = vmatprep.mubr.bf16.mxu0 %v901
    %1771 = vmatmul.mubr.bf16.gmra.mrb[0].mxu0 %v900
    %v1772 = vpop.f32.mrb[0].mxu0
    %v1773 = vadd.f32 %v1044, %v1772
    %v1774 = vpop.f32.mrb[0].mxu0
    %v1775 = vpop.f32.mrb[0].mxu0
    %v1776 = vpop.f32.mrb[0].mxu0
    %1777 = vdwg.mxu0
    %1778 = vmatprep.subr.bf16.mxu0 0
    %1779 = vmatpush1.bf16.msra.mxu0 %v1454
    %1780 = vmatprep.subr.bf16.mxu0 0
    %1781 = vmatpush1.bf16.msra.mxu0 %v1459
    %1782 = vmatprep.subr.bf16.mxu0 0
    %1783 = vmatpush1.bf16.msra.mxu0 %v1464
    %1784 = vmatprep.subr.bf16.mxu0 0
    %1785 = vmatpush1.bf16.msra.mxu0 %v1469
    %1786 = vmatprep.subr.bf16.mxu0 0
    %1787 = vmatpush1.bf16.msra.mxu0 0
    %1788 = vmatprep.subr.bf16.mxu0 0
    %1789 = vmatpush1.bf16.msra.mxu0 0
    %1790 = vmatprep.subr.bf16.mxu0 0
    %1791 = vmatpush1.bf16.msra.mxu0 0
    %1792 = vmatprep.subr.bf16.mxu0 0
    %1793 = vmatpush1.bf16.msra.mxu0 0
    %1794 = vmatprep.subr.bf16.mxu0 0
    %1795 = vmatpush1.bf16.msra.mxu0 0
    %1796 = vmatprep.subr.bf16.mxu0 0
    %1797 = vmatpush1.bf16.msra.mxu0 0
    %1798 = vmatprep.subr.bf16.mxu0 0
    %1799 = vmatpush1.bf16.msra.mxu0 0
    %1800 = vmatprep.subr.bf16.mxu0 0
    %1801 = vmatpush1.bf16.msra.mxu0 0
    %1802 = vmatprep.subr.bf16.mxu0 0
    %1803 = vmatpush1.bf16.msra.mxu0 0
    %1804 = vmatprep.subr.bf16.mxu0 0
    %1805 = vmatpush1.bf16.msra.mxu0 0
    %1806 = vmatprep.subr.bf16.mxu0 0
    %1807 = vmatpush1.bf16.msra.mxu0 0
    %1808 = vmatprep.subr.bf16.mxu0 0
    %1809 = vmatpush1.bf16.msra.mxu0 0
    %1810 = vmatprep.mubr.bf16.mxu0 0
    %1811 = vmatmul.mubr.bf16.gmra.mrb[0].mxu0 %v1572
    %v1812 = vpop.f32.mrb[0].mxu0
    %v1813 = vadd.f32 %v1773, %v1812
    %v1814 = vpop.f32.mrb[0].mxu0
    %v1815 = vpop.f32.mrb[0].mxu0
    %v1816 = vpop.f32.mrb[0].mxu0
    %1817 = vdwg.mxu0
    %v1818 = vpack.c.bf16 %v1650, %v1650
    %v1819 = vpack.c.bf16 %v1652, %v1652
    %v1820 = vpack.c.bf16 %v1732, %v1732
    %v1821 = vpack.c.bf16 %v1734, %v1734
    %v1822 = vpack.c.bf16 %v1813, %v1813
    %v1828 = vunpack.c.l.b16 %v1818
    %v1829 = vunpack.c.l.b16 %v1819
    %v1830 = vunpack.c.l.b16 %v1820
    %v1831 = vunpack.c.l.b16 %v1821
    %v1832 = vunpack.c.l.b16 %v1822
    %v1833 = vpack.c.b16 %v1829, %v1828
    %v1834 = vpack.c.b16 %v1831, %v1830
    %v1835 = vpack.c.b16 %v1832, %v1832
    %1839 = vst [vmem:[#allocation14] sm:$0xff] %v1833
    %1840 = vst [vmem:[#allocation14 + $0x8] sm:$0xff] %v1834
    %1841 = vst [vmem:[#allocation14 + $0x10] sm:$0xf] %v1835
    // Predicated region
    $region58: #{forward.2} parent=1 // pred_check
      _
    $region59: #{forward.2} parent=1 // pred_check_branch
      %1843 = sbr.rel (0) target = $region61
    $region60: #{forward.2} parent=1 // pred_region
      %s1845 = ssub.s32 320, 320
      %1846 = vsyncadd [#allocation4], %s1845
      %s1848 = sshll.u32 [#allocation14], 4
      %s1849 = int_to_ptr.vmem [resolvable:$true] %s1848
      %1851 = dma.vmem_to_hbm [thread:$0]  %s1849, 320, %s7, [#allocation4]
    $region61: #{forward.2} parent=1 // pred_fallthru
      _
    // Predicated region
    $region62: #{forward.2} parent=1 // pred_check
      _
    $region63: #{forward.2} parent=1 // pred_check_branch
      %1853 = sbr.rel (0) target = $region65
    $region64: #{forward.2} parent=1 // pred_region
      %1854 = dma.done [#allocation4], 320
    $region65: #{forward.2} parent=1 // pred_fallthru
      _
    %1855 = vsyncpa [#allocation3], 1
    %1856 = vsyncpa [#allocation6], 1
    %1857 = vsyncpa [#allocation9], 1
    %1858 = vsyncpa [#allocation12], 1
    %1859 = vsyncpa [#allocation4], 1

</llo_original>
